<compile_context>
chip_gen: v5e
topology: v5e:2x2
jax: 0.10.0
libtpu: 0.0.40
codegen_flags: <defaults>
</compile_context>

<pallas_src>
import math

import jax
import jax.numpy as jnp
from jax.experimental import pallas as pl
from jax.experimental.pallas import tpu as pltpu

D_MODEL = 64
N_HEAD = 8
HEAD_DIM = D_MODEL // N_HEAD


def causal_attn_kernel(x_ref, wq_ref, bq_ref, wk_ref, bk_ref, wv_ref, bv_ref,
                       wo_ref, bo_ref, bias_ref, o_ref):
    x = x_ref[0]                                          # (T, D) — this sequence
    # Head batching lives in the (H, D, hd) weight tensors; broadcasting x over the
    # (small) head axis keeps every projection a plain batched MXU matmul with a
    # 64-deep contraction and avoids any unaligned lane slicing / relayout.
    x_b = jnp.broadcast_to(x, (N_HEAD,) + x.shape)        # (H, T, D)

    q = jnp.einsum('htd,hde->hte', x_b, wq_ref[...],
                   preferred_element_type=jnp.float32) + bq_ref[...]   # scale pre-folded
    k = jnp.einsum('htd,hde->hte', x_b, wk_ref[...],
                   preferred_element_type=jnp.float32) + bk_ref[...]
    v = jnp.einsum('htd,hde->hte', x_b, wv_ref[...],
                   preferred_element_type=jnp.float32) + bv_ref[...]   # (H, T, hd)

    # Scores per head + precomputed additive causal bias (0 / -1e30), broadcast
    # over the head axis.  One vadd per score vreg; no iota / int-divide / select.
    s = jnp.einsum('hqd,hkd->hqk', q, k, preferred_element_type=jnp.float32)
    s = s + bias_ref[...]                                  # (H, T, T) + (T, T)

    m = jnp.max(s, axis=-1, keepdims=True)
    p = jnp.exp(s - m)
    l = jnp.sum(p, axis=-1, keepdims=True)                 # (H, T, 1)

    o_h = jnp.einsum('hqk,hkd->hqd', p, v, preferred_element_type=jnp.float32)
    # Deferred softmax normalization on the small (H, T, hd) head output.
    o_h = o_h * pl.reciprocal(l)                           # exact (approx=False)

    # Output projection per head (contraction depth 64), then a cheap major-axis
    # reduction over heads; never re-concatenates head dims into the lane axis.
    y = jnp.einsum('htd,hdo->hto', o_h, wo_ref[...],
                   preferred_element_type=jnp.float32)     # (H, T, D)
    y = jnp.sum(y, axis=0) + bo_ref[...]                   # (T, D)

    # residual_dropout: identity in eval/inference mode.
    # TODO(synk): training-mode dropout would use pltpu.prng_seed / prng_random_bits.
    o_ref[0] = y.astype(o_ref.dtype)


def causal_self_attention(x, wq, bq, wk, bk, wv, bv, wo, bo):
    B, T, D = x.shape
    assert D == D_MODEL

    scale = 1.0 / math.sqrt(HEAD_DIM)

    # Host-side (free) weight prep: fold the attention scale into the Q projection
    # and reshape every projection into per-head slabs so the kernel never has to
    # split the lane dimension.
    def to_heads_w(w):                                     # (D, D) -> (H, D, hd)
        return jnp.transpose(w.reshape(D, N_HEAD, HEAD_DIM), (1, 0, 2))

    def to_heads_b(b):                                     # (1, D) -> (H, 1, hd)
        return jnp.transpose(b.reshape(1, N_HEAD, HEAD_DIM), (1, 0, 2))

    wq_h, bq_h = to_heads_w(wq * scale), to_heads_b(bq * scale)
    wk_h, bk_h = to_heads_w(wk), to_heads_b(bk)
    wv_h, bv_h = to_heads_w(wv), to_heads_b(bv)
    wo_h = wo.reshape(N_HEAD, HEAD_DIM, D)                 # (H, hd, D)

    # Precomputed additive causal bias: 0 where attending is allowed, -1e30 otherwise.
    r = jnp.arange(T, dtype=jnp.int32)[:, None]
    c = jnp.arange(T, dtype=jnp.int32)[None, :]
    attn_bias = jnp.where(r >= c, 0.0, -1e30).astype(jnp.float32)     # (T, T)

    const3 = lambda b: (0, 0, 0)
    const2 = lambda b: (0, 0)

    out = pl.pallas_call(
        causal_attn_kernel,
        out_shape=jax.ShapeDtypeStruct((B, T, D), x.dtype),
        grid=(B,),                                         # one sequence per step; >=2 steps on the test config
        in_specs=[
            pl.BlockSpec((1, T, D), lambda b: (b, 0, 0)),              # x (this sequence)
            pl.BlockSpec((N_HEAD, D, HEAD_DIM), const3),               # Wq per head (scale folded)
            pl.BlockSpec((N_HEAD, 1, HEAD_DIM), const3),               # bq per head
            pl.BlockSpec((N_HEAD, D, HEAD_DIM), const3),               # Wk per head
            pl.BlockSpec((N_HEAD, 1, HEAD_DIM), const3),               # bk per head
            pl.BlockSpec((N_HEAD, D, HEAD_DIM), const3),               # Wv per head
            pl.BlockSpec((N_HEAD, 1, HEAD_DIM), const3),               # bv per head
            pl.BlockSpec((N_HEAD, HEAD_DIM, D), const3),               # Wo per head
            pl.BlockSpec((1, D), const2),                              # bo
            pl.BlockSpec((T, T), const2),                              # additive causal bias
        ],
        out_specs=pl.BlockSpec((1, T, D), lambda b: (b, 0, 0)),
        compiler_params=pltpu.CompilerParams(
            dimension_semantics=("parallel",)),
    )(x, wq_h, bq_h, wk_h, bk_h, wv_h, bv_h, wo_h, bo, attn_bias)
    return out


def init_linear(kw, kb, fan_in, fan_out):
    # Matches PyTorch nn.Linear default init: U(-1/sqrt(fan_in), 1/sqrt(fan_in)).
    bound = 1.0 / math.sqrt(fan_in)
    w = jax.random.uniform(kw, (fan_in, fan_out), jnp.float32, -bound, bound)
    b = jax.random.uniform(kb, (1, fan_out), jnp.float32, -bound, bound)
    return w, b


def reference_attention(x, wq, bq, wk, bk, wv, bv, wo, bo):
    """Pure-JAX reference mirroring the PyTorch module (eval mode)."""
    B, T, D = x.shape
    q = x @ wq + bq
    k = x @ wk + bk
    v = x @ wv + bv
    q = q.reshape(B, T, N_HEAD, HEAD_DIM).transpose(0, 2, 1, 3)
    k = k.reshape(B, T, N_HEAD, HEAD_DIM).transpose(0, 2, 1, 3)
    v = v.reshape(B, T, N_HEAD, HEAD_DIM).transpose(0, 2, 1, 3)
    s = jnp.einsum('bhqd,bhkd->bhqk', q, k) / math.sqrt(HEAD_DIM)
    mask = jnp.tril(jnp.ones((T, T), dtype=bool))
    s = jnp.where(mask, s, -jnp.inf)
    p = jax.nn.softmax(s, axis=-1)
    o = jnp.einsum('bhqk,bhkd->bhqd', p, v)
    o = o.transpose(0, 2, 1, 3).reshape(B, T, D)
    return o @ wo + bo


if __name__ == "__main__":
    B, T = 2, 8

    key = jax.random.PRNGKey(0)
    keys = jax.random.split(key, 9)
    wq, bq = init_linear(keys[0], keys[1], D_MODEL, D_MODEL)
    wk, bk = init_linear(keys[2], keys[3], D_MODEL, D_MODEL)
    wv, bv = init_linear(keys[4], keys[5], D_MODEL, D_MODEL)
    wo, bo = init_linear(keys[6], keys[7], D_MODEL, D_MODEL)

    x = jax.random.normal(keys[8], (B, T, D_MODEL), dtype=jnp.float32)

    out = causal_self_attention(x, wq, bq, wk, bk, wv, bv, wo, bo)
    jax.block_until_ready(out)
    assert out.shape == (B, T, D_MODEL)

    ref = reference_attention(x, wq, bq, wk, bk, wv, bv, wo, bo)
    max_err = float(jnp.max(jnp.abs(out - ref)))
    assert max_err < 1e-2, f"mismatch vs reference: {max_err}"

    print("KERNEL_OK")
</pallas_src>

<mosaic_0001>
module attributes {stable_mosaic.version = 11 : i64} {
  func.func @causal_attn_kernel(%arg0: i32, %arg1: memref<1x8x64xf32, #tpu.memory_space<vmem>>, %arg2: memref<8x64x8xf32, #tpu.memory_space<vmem>>, %arg3: memref<8x1x8xf32, #tpu.memory_space<vmem>>, %arg4: memref<8x64x8xf32, #tpu.memory_space<vmem>>, %arg5: memref<8x1x8xf32, #tpu.memory_space<vmem>>, %arg6: memref<8x64x8xf32, #tpu.memory_space<vmem>>, %arg7: memref<8x1x8xf32, #tpu.memory_space<vmem>>, %arg8: memref<8x8x64xf32, #tpu.memory_space<vmem>>, %arg9: memref<1x64xf32, #tpu.memory_space<vmem>>, %arg10: memref<8x8xf32, #tpu.memory_space<vmem>>, %arg11: memref<1x8x64xf32, #tpu.memory_space<vmem>>) attributes {dimension_semantics = [#tpu.dimension_semantics<parallel>], iteration_bounds = array<i64: 2>, scalar_prefetch = 0 : i64, scratch_operands = 0 : i64, tpu.core_type = #tpu.core_type<tc>, window_params = [{transform_indices = @transform_0, window_bounds = array<i64: 1, 8, 64>}, {pipeline_mode = #tpu.pipeline_mode<synchronous>, transform_indices = @transform_1, window_bounds = array<i64: 8, 64, 8>}, {pipeline_mode = #tpu.pipeline_mode<synchronous>, transform_indices = @transform_2, window_bounds = array<i64: 8, 1, 8>}, {pipeline_mode = #tpu.pipeline_mode<synchronous>, transform_indices = @transform_3, window_bounds = array<i64: 8, 64, 8>}, {pipeline_mode = #tpu.pipeline_mode<synchronous>, transform_indices = @transform_4, window_bounds = array<i64: 8, 1, 8>}, {pipeline_mode = #tpu.pipeline_mode<synchronous>, transform_indices = @transform_5, window_bounds = array<i64: 8, 64, 8>}, {pipeline_mode = #tpu.pipeline_mode<synchronous>, transform_indices = @transform_6, window_bounds = array<i64: 8, 1, 8>}, {pipeline_mode = #tpu.pipeline_mode<synchronous>, transform_indices = @transform_7, window_bounds = array<i64: 8, 8, 64>}, {pipeline_mode = #tpu.pipeline_mode<synchronous>, transform_indices = @transform_8, window_bounds = array<i64: 1, 64>}, {pipeline_mode = #tpu.pipeline_mode<synchronous>, transform_indices = @transform_9, window_bounds = array<i64: 8, 8>}, {transform_indices = @transform_10, window_bounds = array<i64: 1, 8, 64>}]} {
    %c0 = arith.constant 0 : index
    %c0_0 = arith.constant 0 : index
    %c0_1 = arith.constant 0 : index
    %0 = vector.load %arg1[%c0, %c0_0, %c0_1] : memref<1x8x64xf32, #tpu.memory_space<vmem>>, vector<1x8x64xf32>
    %1 = vector.shape_cast %0 : vector<1x8x64xf32> to vector<8x64xf32>
    %2 = vector.shape_cast %1 : vector<8x64xf32> to vector<1x8x64xf32>
    %3 = vector.broadcast %2 : vector<1x8x64xf32> to vector<8x8x64xf32>
    %c0_2 = arith.constant 0 : index
    %c0_3 = arith.constant 0 : index
    %c0_4 = arith.constant 0 : index
    %4 = vector.load %arg2[%c0_2, %c0_3, %c0_4] : memref<8x64x8xf32, #tpu.memory_space<vmem>>, vector<8x64x8xf32>
    "tpu.trace_start"() <{level = 10 : i32, message = "htd,hde->hte"}> : () -> ()
    %cst = arith.constant dense<0.000000e+00> : vector<8x8x8xf32>
    %5 = tpu.matmul %3, %4, %cst {dimension_numbers = #tpu.dot_dimension_numbers<[2], [1], [1], [2], [0, 0, 0, 1, 1, 2], [0], [0]>} : vector<8x8x64xf32>, vector<8x64x8xf32>, vector<8x8x8xf32> -> vector<8x8x8xf32>
    "tpu.trace_stop"() : () -> ()
    %c0_5 = arith.constant 0 : index
    %c0_6 = arith.constant 0 : index
    %c0_7 = arith.constant 0 : index
    %6 = vector.load %arg3[%c0_5, %c0_6, %c0_7] : memref<8x1x8xf32, #tpu.memory_space<vmem>>, vector<8x1x8xf32>
    %7 = vector.broadcast %6 : vector<8x1x8xf32> to vector<8x8x8xf32>
    %8 = arith.addf %5, %7 : vector<8x8x8xf32>
    %c0_8 = arith.constant 0 : index
    %c0_9 = arith.constant 0 : index
    %c0_10 = arith.constant 0 : index
    %9 = vector.load %arg4[%c0_8, %c0_9, %c0_10] : memref<8x64x8xf32, #tpu.memory_space<vmem>>, vector<8x64x8xf32>
    "tpu.trace_start"() <{level = 10 : i32, message = "htd,hde->hte"}> : () -> ()
    %cst_11 = arith.constant dense<0.000000e+00> : vector<8x8x8xf32>
    %10 = tpu.matmul %3, %9, %cst_11 {dimension_numbers = #tpu.dot_dimension_numbers<[2], [1], [1], [2], [0, 0, 0, 1, 1, 2], [0], [0]>} : vector<8x8x64xf32>, vector<8x64x8xf32>, vector<8x8x8xf32> -> vector<8x8x8xf32>
    "tpu.trace_stop"() : () -> ()
    %c0_12 = arith.constant 0 : index
    %c0_13 = arith.constant 0 : index
    %c0_14 = arith.constant 0 : index
    %11 = vector.load %arg5[%c0_12, %c0_13, %c0_14] : memref<8x1x8xf32, #tpu.memory_space<vmem>>, vector<8x1x8xf32>
    %12 = vector.broadcast %11 : vector<8x1x8xf32> to vector<8x8x8xf32>
    %13 = arith.addf %10, %12 : vector<8x8x8xf32>
    %c0_15 = arith.constant 0 : index
    %c0_16 = arith.constant 0 : index
    %c0_17 = arith.constant 0 : index
    %14 = vector.load %arg6[%c0_15, %c0_16, %c0_17] : memref<8x64x8xf32, #tpu.memory_space<vmem>>, vector<8x64x8xf32>
    "tpu.trace_start"() <{level = 10 : i32, message = "htd,hde->hte"}> : () -> ()
    %cst_18 = arith.constant dense<0.000000e+00> : vector<8x8x8xf32>
    %15 = tpu.matmul %3, %14, %cst_18 {dimension_numbers = #tpu.dot_dimension_numbers<[2], [1], [1], [2], [0, 0, 0, 1, 1, 2], [0], [0]>} : vector<8x8x64xf32>, vector<8x64x8xf32>, vector<8x8x8xf32> -> vector<8x8x8xf32>
    "tpu.trace_stop"() : () -> ()
    %c0_19 = arith.constant 0 : index
    %c0_20 = arith.constant 0 : index
    %c0_21 = arith.constant 0 : index
    %16 = vector.load %arg7[%c0_19, %c0_20, %c0_21] : memref<8x1x8xf32, #tpu.memory_space<vmem>>, vector<8x1x8xf32>
    %17 = vector.broadcast %16 : vector<8x1x8xf32> to vector<8x8x8xf32>
    %18 = arith.addf %15, %17 : vector<8x8x8xf32>
    "tpu.trace_start"() <{level = 10 : i32, message = "hqd,hkd->hqk"}> : () -> ()
    %cst_22 = arith.constant dense<0.000000e+00> : vector<8x8x8xf32>
    %19 = tpu.matmul %8, %13, %cst_22 {dimension_numbers = #tpu.dot_dimension_numbers<[2], [2], [1], [1], [0, 0, 0, 1, 1, 1], [0], [0]>} : vector<8x8x8xf32>, vector<8x8x8xf32>, vector<8x8x8xf32> -> vector<8x8x8xf32>
    "tpu.trace_stop"() : () -> ()
    %c0_23 = arith.constant 0 : index
    %c0_24 = arith.constant 0 : index
    %20 = vector.load %arg10[%c0_23, %c0_24] : memref<8x8xf32, #tpu.memory_space<vmem>>, vector<8x8xf32>
    %21 = vector.shape_cast %20 : vector<8x8xf32> to vector<1x8x8xf32>
    %22 = vector.broadcast %21 : vector<1x8x8xf32> to vector<8x8x8xf32>
    %23 = arith.addf %19, %22 : vector<8x8x8xf32>
    %cst_25 = arith.constant dense<0xFF800000> : vector<8x8xf32>
    %24 = vector.multi_reduction <maximumf>, %23, %cst_25 [2] : vector<8x8x8xf32> to vector<8x8xf32>
    %25 = vector.shape_cast %24 : vector<8x8xf32> to vector<8x8x1xf32>
    %26 = vector.broadcast %25 : vector<8x8x1xf32> to vector<8x8x8xf32>
    %27 = arith.subf %23, %26 : vector<8x8x8xf32>
    %28 = math.exp %27 : vector<8x8x8xf32>
    %cst_26 = arith.constant dense<0.000000e+00> : vector<8x8xf32>
    %29 = vector.multi_reduction <add>, %28, %cst_26 [2] : vector<8x8x8xf32> to vector<8x8xf32>
    %30 = vector.shape_cast %29 : vector<8x8xf32> to vector<8x8x1xf32>
    "tpu.trace_start"() <{level = 10 : i32, message = "hqk,hkd->hqd"}> : () -> ()
    %cst_27 = arith.constant dense<0.000000e+00> : vector<8x8x8xf32>
    %31 = tpu.matmul %28, %18, %cst_27 {dimension_numbers = #tpu.dot_dimension_numbers<[2], [1], [1], [2], [0, 0, 0, 1, 1, 2], [0], [0]>} : vector<8x8x8xf32>, vector<8x8x8xf32>, vector<8x8x8xf32> -> vector<8x8x8xf32>
    "tpu.trace_stop"() : () -> ()
    %32 = tpu.reciprocal %30 : vector<8x8x1xf32> -> vector<8x8x1xf32>
    %33 = vector.broadcast %32 : vector<8x8x1xf32> to vector<8x8x8xf32>
    %34 = arith.mulf %31, %33 : vector<8x8x8xf32>
    %c0_28 = arith.constant 0 : index
    %c0_29 = arith.constant 0 : index
    %c0_30 = arith.constant 0 : index
    %35 = vector.load %arg8[%c0_28, %c0_29, %c0_30] : memref<8x8x64xf32, #tpu.memory_space<vmem>>, vector<8x8x64xf32>
    "tpu.trace_start"() <{level = 10 : i32, message = "htd,hdo->hto"}> : () -> ()
    %cst_31 = arith.constant dense<0.000000e+00> : vector<8x8x64xf32>
    %36 = tpu.matmul %34, %35, %cst_31 {dimension_numbers = #tpu.dot_dimension_numbers<[2], [1], [1], [2], [0, 0, 0, 1, 1, 2], [0], [0]>} : vector<8x8x8xf32>, vector<8x8x64xf32>, vector<8x8x64xf32> -> vector<8x8x64xf32>
    "tpu.trace_stop"() : () -> ()
    %cst_32 = arith.constant dense<0.000000e+00> : vector<8x64xf32>
    %37 = vector.multi_reduction <add>, %36, %cst_32 [0] : vector<8x8x64xf32> to vector<8x64xf32>
    %c0_33 = arith.constant 0 : index
    %c0_34 = arith.constant 0 : index
    %38 = vector.load %arg9[%c0_33, %c0_34] : memref<1x64xf32, #tpu.memory_space<vmem>>, vector<1x64xf32>
    %39 = vector.broadcast %38 : vector<1x64xf32> to vector<8x64xf32>
    %40 = arith.addf %37, %39 : vector<8x64xf32>
    %c0_35 = arith.constant 0 : index
    %c0_36 = arith.constant 0 : index
    %c0_37 = arith.constant 0 : index
    %41 = vector.load %arg11[%c0_35, %c0_36, %c0_37] : memref<1x8x64xf32, #tpu.memory_space<vmem>>, vector<1x8x64xf32>
    %42 = vector.shape_cast %41 : vector<1x8x64xf32> to vector<8x64xf32>
    %43 = vector.shape_cast %40 : vector<8x64xf32> to vector<1x8x64xf32>
    tpu.vector_store %arg11[%c0_35, %c0_36, %c0_37], %43 {strides = array<i32>} : memref<1x8x64xf32, #tpu.memory_space<vmem>>, vector<1x8x64xf32>,
    return
  }
  func.func @transform_0(%arg0: i32) -> (i32, i32, i32) {
    %c0_i32 = arith.constant 0 : i32
    %c0_i32_0 = arith.constant 0 : i32
    %c0_i32_1 = arith.constant 0 : i32
    return %arg0, %c0_i32, %c0_i32_0 : i32, i32, i32
  }
  func.func @transform_1(%arg0: i32) -> (i32, i32, i32) {
    %c0_i32 = arith.constant 0 : i32
    %c0_i32_0 = arith.constant 0 : i32
    %c0_i32_1 = arith.constant 0 : i32
    %c0_i32_2 = arith.constant 0 : i32
    return %c0_i32, %c0_i32_0, %c0_i32_1 : i32, i32, i32
  }
  func.func @transform_2(%arg0: i32) -> (i32, i32, i32) {
    %c0_i32 = arith.constant 0 : i32
    %c0_i32_0 = arith.constant 0 : i32
    %c0_i32_1 = arith.constant 0 : i32
    %c0_i32_2 = arith.constant 0 : i32
    return %c0_i32, %c0_i32_0, %c0_i32_1 : i32, i32, i32
  }
  func.func @transform_3(%arg0: i32) -> (i32, i32, i32) {
    %c0_i32 = arith.constant 0 : i32
    %c0_i32_0 = arith.constant 0 : i32
    %c0_i32_1 = arith.constant 0 : i32
    %c0_i32_2 = arith.constant 0 : i32
    return %c0_i32, %c0_i32_0, %c0_i32_1 : i32, i32, i32
  }
  func.func @transform_4(%arg0: i32) -> (i32, i32, i32) {
    %c0_i32 = arith.constant 0 : i32
    %c0_i32_0 = arith.constant 0 : i32
    %c0_i32_1 = arith.constant 0 : i32
    %c0_i32_2 = arith.constant 0 : i32
    return %c0_i32, %c0_i32_0, %c0_i32_1 : i32, i32, i32
  }
  func.func @transform_5(%arg0: i32) -> (i32, i32, i32) {
    %c0_i32 = arith.constant 0 : i32
    %c0_i32_0 = arith.constant 0 : i32
    %c0_i32_1 = arith.constant 0 : i32
    %c0_i32_2 = arith.constant 0 : i32
    return %c0_i32, %c0_i32_0, %c0_i32_1 : i32, i32, i32
  }
  func.func @transform_6(%arg0: i32) -> (i32, i32, i32) {
    %c0_i32 = arith.constant 0 : i32
    %c0_i32_0 = arith.constant 0 : i32
    %c0_i32_1 = arith.constant 0 : i32
    %c0_i32_2 = arith.constant 0 : i32
    return %c0_i32, %c0_i32_0, %c0_i32_1 : i32, i32, i32
  }
  func.func @transform_7(%arg0: i32) -> (i32, i32, i32) {
    %c0_i32 = arith.constant 0 : i32
    %c0_i32_0 = arith.constant 0 : i32
    %c0_i32_1 = arith.constant 0 : i32
    %c0_i32_2 = arith.constant 0 : i32
    return %c0_i32, %c0_i32_0, %c0_i32_1 : i32, i32, i32
  }
  func.func @transform_8(%arg0: i32) -> (i32, i32) {
    %c0_i32 = arith.constant 0 : i32
    %c0_i32_0 = arith.constant 0 : i32
    %c0_i32_1 = arith.constant 0 : i32
    return %c0_i32, %c0_i32_0 : i32, i32
  }
  func.func @transform_9(%arg0: i32) -> (i32, i32) {
    %c0_i32 = arith.constant 0 : i32
    %c0_i32_0 = arith.constant 0 : i32
    %c0_i32_1 = arith.constant 0 : i32
    return %c0_i32, %c0_i32_0 : i32, i32
  }
  func.func @transform_10(%arg0: i32) -> (i32, i32, i32) {
    %c0_i32 = arith.constant 0 : i32
    %c0_i32_0 = arith.constant 0 : i32
    %c0_i32_1 = arith.constant 0 : i32
    return %arg0, %c0_i32, %c0_i32_0 : i32, i32, i32
  }
}

</mosaic_0001>

<llo_original>
// kernel: tpu_custom_call.1
$region0: #{tpu_custom_call.1}
  #allocation0 [shape = 'u32[]', space=smem, size = 0x4, offset = 0x4, fixed_abs, tag = 'smem constant byte address 0x4 - core index']
  #allocation1 [shape = 'u32[72,128]{1,0:T(1,128)}', space=vmem, size = 0x9000, scoped, tag = 'internal scratch']
  %s0 = inlined_call_operand.vmem [shape: f32[2,8,64], index: 0, kind: input, shape index: {}]
  %s1 = inlined_call_operand.vmem [shape: f32[8,64,8], index: 1, kind: input, shape index: {}]
  %s2 = inlined_call_operand.vmem [shape: f32[8,1,8], index: 2, kind: input, shape index: {}]
  %s3 = inlined_call_operand.vmem [shape: f32[8,64,8], index: 3, kind: input, shape index: {}]
  %s4 = inlined_call_operand.vmem [shape: f32[8,1,8], index: 4, kind: input, shape index: {}]
  %s5 = inlined_call_operand.vmem [shape: f32[8,64,8], index: 5, kind: input, shape index: {}]
  %s6 = inlined_call_operand.vmem [shape: f32[8,1,8], index: 6, kind: input, shape index: {}]
  %s7 = inlined_call_operand.vmem [shape: f32[8,8,64], index: 7, kind: input, shape index: {}]
  %s8 = inlined_call_operand.vmem [shape: f32[1,64], index: 8, kind: input, shape index: {}]
  %s9 = inlined_call_operand.vmem [shape: f32[8,8], index: 9, kind: input, shape index: {}]
  %s10 = inlined_call_operand.hbm [shape: f32[2,8,64], index: 10, kind: output, shape index: {}]
  %s11 = sld [smem:[#allocation0]]
  $region73: #{tpu_custom_call.1} parent=0
    _
  %s13 = ssub.s32 1, %s11
  %s14 = scalar_select 0, %s13, %s11
  $region1: #{tpu_custom_call.1} parent=0
    #allocation2 [shape = 'u8[8192]{0}', space=vmem, size = 0x2000, scoped, tag = 'output window, operand 0']
    #allocation3 [shape = 's32[2]{0}', space=sflag, size = 0x8, scoped, tag = 'scoped memory for tpu_custom_call.1']
    %15 = vsyncpa [#allocation3], 0
    %s16 = scalar_lea.sflag [#allocation3], 1
    %17 = vsyncpa %s16, 0
    loop: start=0, step=1, limit=4
    $region2: #{tpu_custom_call.1} parent=1 // loop_pre_header
      _
    $region3: #{tpu_custom_call.1} parent=1 // loop_header
      %s19 = sphi 0, %s23
      %p20 = scmp.ge.s32.totalorder %s19, 4
      %s29 = sphi 0, %s31
      %s32 = sphi 0, %s29
      %s33 = sphi 0, %s32
      %s49 = sphi 0, %s33
      %s53 = sphi 0, %s53
      %s55 = sphi 0, %s53
      %s56 = sphi 0, %s55
      %s70 = sphi 0, %s56
      %s74 = sphi 0, %s74
      %s76 = sphi 0, %s74
      %s77 = sphi 0, %s76
      %s91 = sphi 0, %s77
      %s95 = sphi 0, %s95
      %s97 = sphi 0, %s95
      %s98 = sphi 0, %s97
      %s112 = sphi 0, %s98
      %s116 = sphi 0, %s116
      %s118 = sphi 0, %s116
      %s119 = sphi 0, %s118
      %s133 = sphi 0, %s119
      %s137 = sphi 0, %s137
      %s139 = sphi 0, %s137
      %s140 = sphi 0, %s139
      %s154 = sphi 0, %s140
      %s158 = sphi 0, %s158
      %s160 = sphi 0, %s158
      %s161 = sphi 0, %s160
      %s175 = sphi 0, %s161
      %s179 = sphi 0, %s179
      %s181 = sphi 0, %s179
      %s182 = sphi 0, %s181
      %s196 = sphi 0, %s182
      %s200 = sphi 0, %s200
      %s202 = sphi 0, %s200
      %s203 = sphi 0, %s202
      %s217 = sphi 0, %s203
      %s221 = sphi 0, %s221
      %s223 = sphi 0, %s221
      %s224 = sphi 0, %s223
      %s238 = sphi 0, %s224
      %s244 = sphi 0, %s246
      %s247 = sphi 0, %s244
      %s248 = sphi 0, %s247
      %s264 = sphi 0, %s248
    $region4: #{tpu_custom_call.1} parent=1 // loop_header_branch
      %22 = sbr.rel (%p20) target = $region8
    $region5: #{tpu_custom_call.1} parent=1 // loop_body
      %s24 = ssub.s32 %s19, 1
      %s25 = ssub.s32 %s19, 2
      %s26 = sadd.s32 %s19, 1
      %s27 = ssub.s32 %s19, %s26
      %p28 = scmp.eq.s32.totalorder %s27, 0
      %s30 = sadd.s32 %s29, 1
      %s31 = scalar_select %p28, %s29, %s30
      %p34 = pneg %p28
      %p35 = scmp.eq.s32.totalorder %s19, 1
      %p36 = por %p34, %p35
      %p37 = scmp.ne.s32.totalorder %s29, %s32
      %p38 = scmp.eq.s32.totalorder %s19, 0
      %p39 = por %p37, %p38
      %p40 = scmp.ne.s32.totalorder %s29, %s32
      %p41 = scmp.eq.s32.totalorder %s24, 1
      %p42 = por %p40, %p41
      %p43 = scmp.ne.s32.totalorder %s32, %s33
      %p44 = scmp.eq.s32.totalorder %s24, 0
      %p45 = por %p43, %p44
      %p46 = scmp.ne.s32.totalorder %s32, %s33
      %p47 = scmp.eq.s32.totalorder %s25, 1
      %p48 = por %p46, %p47
      %p50 = scmp.ne.s32.totalorder %s33, %s49
      %p51 = scmp.eq.s32.totalorder %s25, 0
      %p52 = por %p50, %p51
      %s54 = sadd.s32 %s53, 1
      %p57 = scmp.eq.s32.totalorder %s19, 1
      %p58 = scmp.ne.s32.totalorder %s53, %s55
      %p59 = scmp.eq.s32.totalorder %s19, 0
      %p60 = por %p58, %p59
      %p61 = scmp.ne.s32.totalorder %s53, %s55
      %p62 = scmp.eq.s32.totalorder %s24, 1
      %p63 = por %p61, %p62
      %p64 = scmp.ne.s32.totalorder %s55, %s56
      %p65 = scmp.eq.s32.totalorder %s24, 0
      %p66 = por %p64, %p65
      %p67 = scmp.ne.s32.totalorder %s55, %s56
      %p68 = scmp.eq.s32.totalorder %s25, 1
      %p69 = por %p67, %p68
      %p71 = scmp.ne.s32.totalorder %s56, %s70
      %p72 = scmp.eq.s32.totalorder %s25, 0
      %p73 = por %p71, %p72
      %s75 = sadd.s32 %s74, 1
      %p78 = scmp.eq.s32.totalorder %s19, 1
      %p79 = scmp.ne.s32.totalorder %s74, %s76
      %p80 = scmp.eq.s32.totalorder %s19, 0
      %p81 = por %p79, %p80
      %p82 = scmp.ne.s32.totalorder %s74, %s76
      %p83 = scmp.eq.s32.totalorder %s24, 1
      %p84 = por %p82, %p83
      %p85 = scmp.ne.s32.totalorder %s76, %s77
      %p86 = scmp.eq.s32.totalorder %s24, 0
      %p87 = por %p85, %p86
      %p88 = scmp.ne.s32.totalorder %s76, %s77
      %p89 = scmp.eq.s32.totalorder %s25, 1
      %p90 = por %p88, %p89
      %p92 = scmp.ne.s32.totalorder %s77, %s91
      %p93 = scmp.eq.s32.totalorder %s25, 0
      %p94 = por %p92, %p93
      %s96 = sadd.s32 %s95, 1
      %p99 = scmp.eq.s32.totalorder %s19, 1
      %p100 = scmp.ne.s32.totalorder %s95, %s97
      %p101 = scmp.eq.s32.totalorder %s19, 0
      %p102 = por %p100, %p101
      %p103 = scmp.ne.s32.totalorder %s95, %s97
      %p104 = scmp.eq.s32.totalorder %s24, 1
      %p105 = por %p103, %p104
      %p106 = scmp.ne.s32.totalorder %s97, %s98
      %p107 = scmp.eq.s32.totalorder %s24, 0
      %p108 = por %p106, %p107
      %p109 = scmp.ne.s32.totalorder %s97, %s98
      %p110 = scmp.eq.s32.totalorder %s25, 1
      %p111 = por %p109, %p110
      %p113 = scmp.ne.s32.totalorder %s98, %s112
      %p114 = scmp.eq.s32.totalorder %s25, 0
      %p115 = por %p113, %p114
      %s117 = sadd.s32 %s116, 1
      %p120 = scmp.eq.s32.totalorder %s19, 1
      %p121 = scmp.ne.s32.totalorder %s116, %s118
      %p122 = scmp.eq.s32.totalorder %s19, 0
      %p123 = por %p121, %p122
      %p124 = scmp.ne.s32.totalorder %s116, %s118
      %p125 = scmp.eq.s32.totalorder %s24, 1
      %p126 = por %p124, %p125
      %p127 = scmp.ne.s32.totalorder %s118, %s119
      %p128 = scmp.eq.s32.totalorder %s24, 0
      %p129 = por %p127, %p128
      %p130 = scmp.ne.s32.totalorder %s118, %s119
      %p131 = scmp.eq.s32.totalorder %s25, 1
      %p132 = por %p130, %p131
      %p134 = scmp.ne.s32.totalorder %s119, %s133
      %p135 = scmp.eq.s32.totalorder %s25, 0
      %p136 = por %p134, %p135
      %s138 = sadd.s32 %s137, 1
      %p141 = scmp.eq.s32.totalorder %s19, 1
      %p142 = scmp.ne.s32.totalorder %s137, %s139
      %p143 = scmp.eq.s32.totalorder %s19, 0
      %p144 = por %p142, %p143
      %p145 = scmp.ne.s32.totalorder %s137, %s139
      %p146 = scmp.eq.s32.totalorder %s24, 1
      %p147 = por %p145, %p146
      %p148 = scmp.ne.s32.totalorder %s139, %s140
      %p149 = scmp.eq.s32.totalorder %s24, 0
      %p150 = por %p148, %p149
      %p151 = scmp.ne.s32.totalorder %s139, %s140
      %p152 = scmp.eq.s32.totalorder %s25, 1
      %p153 = por %p151, %p152
      %p155 = scmp.ne.s32.totalorder %s140, %s154
      %p156 = scmp.eq.s32.totalorder %s25, 0
      %p157 = por %p155, %p156
      %s159 = sadd.s32 %s158, 1
      %p162 = scmp.eq.s32.totalorder %s19, 1
      %p163 = scmp.ne.s32.totalorder %s158, %s160
      %p164 = scmp.eq.s32.totalorder %s19, 0
      %p165 = por %p163, %p164
      %p166 = scmp.ne.s32.totalorder %s158, %s160
      %p167 = scmp.eq.s32.totalorder %s24, 1
      %p168 = por %p166, %p167
      %p169 = scmp.ne.s32.totalorder %s160, %s161
      %p170 = scmp.eq.s32.totalorder %s24, 0
      %p171 = por %p169, %p170
      %p172 = scmp.ne.s32.totalorder %s160, %s161
      %p173 = scmp.eq.s32.totalorder %s25, 1
      %p174 = por %p172, %p173
      %p176 = scmp.ne.s32.totalorder %s161, %s175
      %p177 = scmp.eq.s32.totalorder %s25, 0
      %p178 = por %p176, %p177
      %s180 = sadd.s32 %s179, 1
      %p183 = scmp.eq.s32.totalorder %s19, 1
      %p184 = scmp.ne.s32.totalorder %s179, %s181
      %p185 = scmp.eq.s32.totalorder %s19, 0
      %p186 = por %p184, %p185
      %p187 = scmp.ne.s32.totalorder %s179, %s181
      %p188 = scmp.eq.s32.totalorder %s24, 1
      %p189 = por %p187, %p188
      %p190 = scmp.ne.s32.totalorder %s181, %s182
      %p191 = scmp.eq.s32.totalorder %s24, 0
      %p192 = por %p190, %p191
      %p193 = scmp.ne.s32.totalorder %s181, %s182
      %p194 = scmp.eq.s32.totalorder %s25, 1
      %p195 = por %p193, %p194
      %p197 = scmp.ne.s32.totalorder %s182, %s196
      %p198 = scmp.eq.s32.totalorder %s25, 0
      %p199 = por %p197, %p198
      %s201 = sadd.s32 %s200, 1
      %p204 = scmp.eq.s32.totalorder %s19, 1
      %p205 = scmp.ne.s32.totalorder %s200, %s202
      %p206 = scmp.eq.s32.totalorder %s19, 0
      %p207 = por %p205, %p206
      %p208 = scmp.ne.s32.totalorder %s200, %s202
      %p209 = scmp.eq.s32.totalorder %s24, 1
      %p210 = por %p208, %p209
      %p211 = scmp.ne.s32.totalorder %s202, %s203
      %p212 = scmp.eq.s32.totalorder %s24, 0
      %p213 = por %p211, %p212
      %p214 = scmp.ne.s32.totalorder %s202, %s203
      %p215 = scmp.eq.s32.totalorder %s25, 1
      %p216 = por %p214, %p215
      %p218 = scmp.ne.s32.totalorder %s203, %s217
      %p219 = scmp.eq.s32.totalorder %s25, 0
      %p220 = por %p218, %p219
      %s222 = sadd.s32 %s221, 1
      %p225 = scmp.eq.s32.totalorder %s19, 1
      %p226 = scmp.ne.s32.totalorder %s221, %s223
      %p227 = scmp.eq.s32.totalorder %s19, 0
      %p228 = por %p226, %p227
      %p229 = scmp.ne.s32.totalorder %s221, %s223
      %p230 = scmp.eq.s32.totalorder %s24, 1
      %p231 = por %p229, %p230
      %p232 = scmp.ne.s32.totalorder %s223, %s224
      %p233 = scmp.eq.s32.totalorder %s24, 0
      %p234 = por %p232, %p233
      %p235 = scmp.ne.s32.totalorder %s223, %s224
      %p236 = scmp.eq.s32.totalorder %s25, 1
      %p237 = por %p235, %p236
      %p239 = scmp.ne.s32.totalorder %s224, %s238
      %p240 = scmp.eq.s32.totalorder %s25, 0
      %p241 = por %p239, %p240
      %s242 = ssub.s32 %s19, %s26
      %p243 = scmp.eq.s32.totalorder %s242, 0
      %s245 = sadd.s32 %s244, 1
      %s246 = scalar_select %p243, %s244, %s245
      %p249 = pneg %p243
      %p250 = scmp.eq.s32.totalorder %s19, 1
      %p251 = por %p249, %p250
      %p252 = scmp.ne.s32.totalorder %s244, %s247
      %p253 = scmp.eq.s32.totalorder %s19, 0
      %p254 = por %p252, %p253
      %p255 = scmp.ne.s32.totalorder %s244, %s247
      %p256 = scmp.eq.s32.totalorder %s24, 1
      %p257 = por %p255, %p256
      %p258 = scmp.ne.s32.totalorder %s247, %s248
      %p259 = scmp.eq.s32.totalorder %s24, 0
      %p260 = por %p258, %p259
      %p261 = scmp.ne.s32.totalorder %s247, %s248
      %p262 = scmp.eq.s32.totalorder %s25, 1
      %p263 = por %p261, %p262
      %p265 = scmp.ne.s32.totalorder %s248, %s264
      %p266 = scmp.eq.s32.totalorder %s25, 0
      %p267 = por %p265, %p266
      %p268 = scmp.le.s32.totalorder 1, %s19
      %p269 = scmp.lt.s32.totalorder %s19, 3
      %p270 = pnand %p268, %p269
      %p271 = pneg %p270
      // Predicated region
      $region9: #{tpu_custom_call.1} parent=5 // pred_check
        _
      $region10: #{tpu_custom_call.1} parent=5 // pred_check_branch
        %273 = sbr.rel (%p270) target = $region12
      $region11: #{tpu_custom_call.1} parent=5 // pred_region
        %s274 = ssub.s32 %s19, 1
        // Predicated region
        $region13: #{tpu_custom_call.1} parent=11 // pred_check
          %p275 = pneg %p66
        $region14: #{tpu_custom_call.1} parent=11 // pred_check_branch
          %277 = sbr.rel (%p275) target = $region16
        $region15: #{tpu_custom_call.1} parent=11 // pred_region
          _
        $region16: #{tpu_custom_call.1} parent=11 // pred_fallthru
          _
        // Predicated region
        $region17: #{tpu_custom_call.1} parent=11 // pred_check
          %p278 = pneg %p87
        $region18: #{tpu_custom_call.1} parent=11 // pred_check_branch
          %280 = sbr.rel (%p278) target = $region20
        $region19: #{tpu_custom_call.1} parent=11 // pred_region
          _
        $region20: #{tpu_custom_call.1} parent=11 // pred_fallthru
          _
        // Predicated region
        $region21: #{tpu_custom_call.1} parent=11 // pred_check
          %p281 = pneg %p108
        $region22: #{tpu_custom_call.1} parent=11 // pred_check_branch
          %283 = sbr.rel (%p281) target = $region24
        $region23: #{tpu_custom_call.1} parent=11 // pred_region
          _
        $region24: #{tpu_custom_call.1} parent=11 // pred_fallthru
          _
        // Predicated region
        $region25: #{tpu_custom_call.1} parent=11 // pred_check
          %p284 = pneg %p129
        $region26: #{tpu_custom_call.1} parent=11 // pred_check_branch
          %286 = sbr.rel (%p284) target = $region28
        $region27: #{tpu_custom_call.1} parent=11 // pred_region
          _
        $region28: #{tpu_custom_call.1} parent=11 // pred_fallthru
          _
        // Predicated region
        $region29: #{tpu_custom_call.1} parent=11 // pred_check
          %p287 = pneg %p150
        $region30: #{tpu_custom_call.1} parent=11 // pred_check_branch
          %289 = sbr.rel (%p287) target = $region32
        $region31: #{tpu_custom_call.1} parent=11 // pred_region
          _
        $region32: #{tpu_custom_call.1} parent=11 // pred_fallthru
          _
        // Predicated region
        $region33: #{tpu_custom_call.1} parent=11 // pred_check
          %p290 = pneg %p171
        $region34: #{tpu_custom_call.1} parent=11 // pred_check_branch
          %292 = sbr.rel (%p290) target = $region36
        $region35: #{tpu_custom_call.1} parent=11 // pred_region
          _
        $region36: #{tpu_custom_call.1} parent=11 // pred_fallthru
          _
        // Predicated region
        $region37: #{tpu_custom_call.1} parent=11 // pred_check
          %p293 = pneg %p192
        $region38: #{tpu_custom_call.1} parent=11 // pred_check_branch
          %295 = sbr.rel (%p293) target = $region40
        $region39: #{tpu_custom_call.1} parent=11 // pred_region
          _
        $region40: #{tpu_custom_call.1} parent=11 // pred_fallthru
          _
        // Predicated region
        $region41: #{tpu_custom_call.1} parent=11 // pred_check
          %p296 = pneg %p213
        $region42: #{tpu_custom_call.1} parent=11 // pred_check_branch
          %298 = sbr.rel (%p296) target = $region44
        $region43: #{tpu_custom_call.1} parent=11 // pred_region
          _
        $region44: #{tpu_custom_call.1} parent=11 // pred_fallthru
          _
        // Predicated region
        $region45: #{tpu_custom_call.1} parent=11 // pred_check
          %p299 = pneg %p234
        $region46: #{tpu_custom_call.1} parent=11 // pred_check_branch
          %301 = sbr.rel (%p299) target = $region48
        $region47: #{tpu_custom_call.1} parent=11 // pred_region
          _
        $region48: #{tpu_custom_call.1} parent=11 // pred_fallthru
          _
      $region12: #{tpu_custom_call.1} parent=5 // pred_fallthru
        _
      %p302 = scmp.lt.s32.totalorder %s19, 2
      // Predicated region
      $region49: #{tpu_custom_call.1} parent=5 // pred_check
        %p303 = pneg %p302
      $region50: #{tpu_custom_call.1} parent=5 // pred_check_branch
        %305 = sbr.rel (%p303) target = $region52
      $region51: #{tpu_custom_call.1} parent=5 // pred_region
        // Predicated region
        $region53: #{tpu_custom_call.1} parent=51 // pred_check
          %p306 = pneg %p39
        $region54: #{tpu_custom_call.1} parent=51 // pred_check_branch
          %308 = sbr.rel (%p306) target = $region56
        $region55: #{tpu_custom_call.1} parent=51 // pred_region
          %p309 = scmp.lt.s32.totalorder %s19, 1
          %s310 = scalar_select %p309, %s19, 1
          %s311 = smul.addr %s310, 8
          %s312 = scalar_lea.vmem %s0, %s311
        $region56: #{tpu_custom_call.1} parent=51 // pred_fallthru
          _
      $region52: #{tpu_custom_call.1} parent=5 // pred_fallthru
        _
      %p313 = scmp.le.s32.totalorder 1, %s19
      %p314 = scmp.lt.s32.totalorder %s19, 3
      %p315 = pnand %p313, %p314
      %p316 = pneg %p315
      // Predicated region
      $region57: #{tpu_custom_call.1} parent=5 // pred_check
        _
      $region58: #{tpu_custom_call.1} parent=5 // pred_check_branch
        %318 = sbr.rel (%p315) target = $region60
      $region59: #{tpu_custom_call.1} parent=5 // pred_region
        %s319 = ssub.s32 %s19, 1
        %p320 = scmp.lt.s32.totalorder %s24, 1
        %s321 = scalar_select %p320, %s24, 1
        %s322 = smul.addr %s321, 8
        %s323 = scalar_lea.vmem %s0, %s322
        %p324 = pneg %p45
        %p325 = pneg %p42
        %p326 = pneg %p66
        %p327 = pneg %p63
        %p328 = pneg %p87
        %p329 = pneg %p84
        %p330 = pneg %p108
        %p331 = pneg %p105
        %p332 = pneg %p129
        %p333 = pneg %p126
        %p334 = pneg %p150
        %p335 = pneg %p147
        %p336 = pneg %p171
        %p337 = pneg %p168
        %p338 = pneg %p192
        %p339 = pneg %p189
        %p340 = pneg %p213
        %p341 = pneg %p210
        %p342 = pneg %p234
        %p343 = pneg %p231
        %p344 = pneg %p260
        %p345 = pneg %p257
        %s346 = sand.u32 %s247, 1
        %s347 = scalar_lea.sflag [#allocation3], %s346
        %s348 = sand.u32 %s247, 1
        %s349 = smul.addr %s348, 8
        %s350 = scalar_lea.vmem [#allocation2], %s349
        %p351 = scmp.lt.s32.totalorder %s24, 1
        %s352 = scalar_select %p351, %s24, 1
        %s353 = smul.addr %s352, 8
        %s354 = scalar_lea.vmem %s0, %s353
        %v355 = vld [vmem:[%s354] sm:$0xff]
        %v356 = vld [vmem:[%s1] sm:$0xff]
        %v357 = vld [vmem:[%s1 + $0x8] sm:$0xff]
        %v358 = vld [vmem:[%s1 + $0x10] sm:$0xff]
        %v359 = vld [vmem:[%s1 + $0x18] sm:$0xff]
        %v360 = vld [vmem:[%s1 + $0x20] sm:$0xff]
        %v361 = vld [vmem:[%s1 + $0x28] sm:$0xff]
        %v362 = vld [vmem:[%s1 + $0x30] sm:$0xff]
        %v363 = vld [vmem:[%s1 + $0x38] sm:$0xff]
        %v364 = vld [vmem:[%s1 + $0x40] sm:$0xff]
        %v365 = vld [vmem:[%s1 + $0x48] sm:$0xff]
        %v366 = vld [vmem:[%s1 + $0x50] sm:$0xff]
        %v367 = vld [vmem:[%s1 + $0x58] sm:$0xff]
        %v368 = vld [vmem:[%s1 + $0x60] sm:$0xff]
        %v369 = vld [vmem:[%s1 + $0x68] sm:$0xff]
        %v370 = vld [vmem:[%s1 + $0x70] sm:$0xff]
        %v371 = vld [vmem:[%s1 + $0x78] sm:$0xff]
        %v372 = vld [vmem:[%s1 + $0x80] sm:$0xff]
        %v373 = vld [vmem:[%s1 + $0x88] sm:$0xff]
        %v374 = vld [vmem:[%s1 + $0x90] sm:$0xff]
        %v375 = vld [vmem:[%s1 + $0x98] sm:$0xff]
        %v376 = vld [vmem:[%s1 + $0xa0] sm:$0xff]
        %v377 = vld [vmem:[%s1 + $0xa8] sm:$0xff]
        %v378 = vld [vmem:[%s1 + $0xb0] sm:$0xff]
        %v379 = vld [vmem:[%s1 + $0xb8] sm:$0xff]
        %v380 = vld [vmem:[%s1 + $0xc0] sm:$0xff]
        %v381 = vld [vmem:[%s1 + $0xc8] sm:$0xff]
        %v382 = vld [vmem:[%s1 + $0xd0] sm:$0xff]
        %v383 = vld [vmem:[%s1 + $0xd8] sm:$0xff]
        %v384 = vld [vmem:[%s1 + $0xe0] sm:$0xff]
        %v385 = vld [vmem:[%s1 + $0xe8] sm:$0xff]
        %v386 = vld [vmem:[%s1 + $0xf0] sm:$0xff]
        %v387 = vld [vmem:[%s1 + $0xf8] sm:$0xff]
        %v388 = vld [vmem:[%s1 + $0x100] sm:$0xff]
        %v389 = vld [vmem:[%s1 + $0x108] sm:$0xff]
        %v390 = vld [vmem:[%s1 + $0x110] sm:$0xff]
        %v391 = vld [vmem:[%s1 + $0x118] sm:$0xff]
        %v392 = vld [vmem:[%s1 + $0x120] sm:$0xff]
        %v393 = vld [vmem:[%s1 + $0x128] sm:$0xff]
        %v394 = vld [vmem:[%s1 + $0x130] sm:$0xff]
        %v395 = vld [vmem:[%s1 + $0x138] sm:$0xff]
        %v396 = vld [vmem:[%s1 + $0x140] sm:$0xff]
        %v397 = vld [vmem:[%s1 + $0x148] sm:$0xff]
        %v398 = vld [vmem:[%s1 + $0x150] sm:$0xff]
        %v399 = vld [vmem:[%s1 + $0x158] sm:$0xff]
        %v400 = vld [vmem:[%s1 + $0x160] sm:$0xff]
        %v401 = vld [vmem:[%s1 + $0x168] sm:$0xff]
        %v402 = vld [vmem:[%s1 + $0x170] sm:$0xff]
        %v403 = vld [vmem:[%s1 + $0x178] sm:$0xff]
        %v404 = vld [vmem:[%s1 + $0x180] sm:$0xff]
        %v405 = vld [vmem:[%s1 + $0x188] sm:$0xff]
        %v406 = vld [vmem:[%s1 + $0x190] sm:$0xff]
        %v407 = vld [vmem:[%s1 + $0x198] sm:$0xff]
        %v408 = vld [vmem:[%s1 + $0x1a0] sm:$0xff]
        %v409 = vld [vmem:[%s1 + $0x1a8] sm:$0xff]
        %v410 = vld [vmem:[%s1 + $0x1b0] sm:$0xff]
        %v411 = vld [vmem:[%s1 + $0x1b8] sm:$0xff]
        %v412 = vld [vmem:[%s1 + $0x1c0] sm:$0xff]
        %v413 = vld [vmem:[%s1 + $0x1c8] sm:$0xff]
        %v414 = vld [vmem:[%s1 + $0x1d0] sm:$0xff]
        %v415 = vld [vmem:[%s1 + $0x1d8] sm:$0xff]
        %v416 = vld [vmem:[%s1 + $0x1e0] sm:$0xff]
        %v417 = vld [vmem:[%s1 + $0x1e8] sm:$0xff]
        %v418 = vld [vmem:[%s1 + $0x1f0] sm:$0xff]
        %v419 = vld [vmem:[%s1 + $0x1f8] sm:$0xff]
        %v420 = vld [vmem:[%s2] sm:$0x1]
        %v421 = vld [vmem:[%s2 + $0x1] sm:$0x1]
        %v422 = vld [vmem:[%s2 + $0x2] sm:$0x1]
        %v423 = vld [vmem:[%s2 + $0x3] sm:$0x1]
        %v424 = vld [vmem:[%s2 + $0x4] sm:$0x1]
        %v425 = vld [vmem:[%s2 + $0x5] sm:$0x1]
        %v426 = vld [vmem:[%s2 + $0x6] sm:$0x1]
        %v427 = vld [vmem:[%s2 + $0x7] sm:$0x1]
        %v436 = vperm.slane %v420, 0
        %v437 = vperm.slane %v421, 0
        %v438 = vperm.slane %v422, 0
        %v439 = vperm.slane %v423, 0
        %v440 = vperm.slane %v424, 0
        %v441 = vperm.slane %v425, 0
        %v442 = vperm.slane %v426, 0
        %v443 = vperm.slane %v427, 0
        %vm452 = vcmask 523264
        %v454 = vsel %vm452, %v355, 0
        %456 = vmatpush.msra.mxu0 0.0
        %457 = vmatpush.msra.mxu0 0.0
        %458 = vmatpush.msra.mxu0 0.0
        %459 = vmatpush.msra.mxu0 0.0
        %460 = vmatpush.msra.mxu0 0.0
        %461 = vmatpush.msra.mxu0 0.0
        %462 = vmatpush.msra.mxu0 0.0
        %463 = vmatpush.msra.mxu0 0.0
        %464 = vmatpush.msra.mxu0 %v363
        %465 = vmatpush.msra.mxu0 %v362
        %466 = vmatpush.msra.mxu0 %v361
        %467 = vmatpush.msra.mxu0 %v360
        %468 = vmatpush.msra.mxu0 %v359
        %469 = vmatpush.msra.mxu0 %v358
        %470 = vmatpush.msra.mxu0 %v357
        %471 = vmatpush.msra.mxu0 %v356
        %472 = vmatmul.f32.gmra.mxu0 %v454
        %v473 = vpop.f32.mrf.mxu0
        %v474 = vadd.f32 %v436, %v473
        %475 = vdwg.mxu0
        %476 = vmatpush.msra.mxu0 0.0
        %477 = vmatpush.msra.mxu0 0.0
        %478 = vmatpush.msra.mxu0 0.0
        %479 = vmatpush.msra.mxu0 0.0
        %480 = vmatpush.msra.mxu0 0.0
        %481 = vmatpush.msra.mxu0 0.0
        %482 = vmatpush.msra.mxu0 0.0
        %483 = vmatpush.msra.mxu0 0.0
        %484 = vmatpush.msra.mxu0 %v371
        %485 = vmatpush.msra.mxu0 %v370
        %486 = vmatpush.msra.mxu0 %v369
        %487 = vmatpush.msra.mxu0 %v368
        %488 = vmatpush.msra.mxu0 %v367
        %489 = vmatpush.msra.mxu0 %v366
        %490 = vmatpush.msra.mxu0 %v365
        %491 = vmatpush.msra.mxu0 %v364
        %492 = vmatmul.f32.gmra.mxu0 %v454
        %v493 = vpop.f32.mrf.mxu0
        %v494 = vadd.f32 %v437, %v493
        %495 = vdwg.mxu0
        %496 = vmatpush.msra.mxu0 0.0
        %497 = vmatpush.msra.mxu0 0.0
        %498 = vmatpush.msra.mxu0 0.0
        %499 = vmatpush.msra.mxu0 0.0
        %500 = vmatpush.msra.mxu0 0.0
        %501 = vmatpush.msra.mxu0 0.0
        %502 = vmatpush.msra.mxu0 0.0
        %503 = vmatpush.msra.mxu0 0.0
        %504 = vmatpush.msra.mxu0 %v379
        %505 = vmatpush.msra.mxu0 %v378
        %506 = vmatpush.msra.mxu0 %v377
        %507 = vmatpush.msra.mxu0 %v376
        %508 = vmatpush.msra.mxu0 %v375
        %509 = vmatpush.msra.mxu0 %v374
        %510 = vmatpush.msra.mxu0 %v373
        %511 = vmatpush.msra.mxu0 %v372
        %512 = vmatmul.f32.gmra.mxu0 %v454
        %v513 = vpop.f32.mrf.mxu0
        %v514 = vadd.f32 %v438, %v513
        %515 = vdwg.mxu0
        %516 = vmatpush.msra.mxu0 0.0
        %517 = vmatpush.msra.mxu0 0.0
        %518 = vmatpush.msra.mxu0 0.0
        %519 = vmatpush.msra.mxu0 0.0
        %520 = vmatpush.msra.mxu0 0.0
        %521 = vmatpush.msra.mxu0 0.0
        %522 = vmatpush.msra.mxu0 0.0
        %523 = vmatpush.msra.mxu0 0.0
        %524 = vmatpush.msra.mxu0 %v387
        %525 = vmatpush.msra.mxu0 %v386
        %526 = vmatpush.msra.mxu0 %v385
        %527 = vmatpush.msra.mxu0 %v384
        %528 = vmatpush.msra.mxu0 %v383
        %529 = vmatpush.msra.mxu0 %v382
        %530 = vmatpush.msra.mxu0 %v381
        %531 = vmatpush.msra.mxu0 %v380
        %532 = vmatmul.f32.gmra.mxu0 %v454
        %v533 = vpop.f32.mrf.mxu0
        %v534 = vadd.f32 %v439, %v533
        %535 = vdwg.mxu0
        %536 = vmatpush.msra.mxu0 0.0
        %537 = vmatpush.msra.mxu0 0.0
        %538 = vmatpush.msra.mxu0 0.0
        %539 = vmatpush.msra.mxu0 0.0
        %540 = vmatpush.msra.mxu0 0.0
        %541 = vmatpush.msra.mxu0 0.0
        %542 = vmatpush.msra.mxu0 0.0
        %543 = vmatpush.msra.mxu0 0.0
        %544 = vmatpush.msra.mxu0 %v395
        %545 = vmatpush.msra.mxu0 %v394
        %546 = vmatpush.msra.mxu0 %v393
        %547 = vmatpush.msra.mxu0 %v392
        %548 = vmatpush.msra.mxu0 %v391
        %549 = vmatpush.msra.mxu0 %v390
        %550 = vmatpush.msra.mxu0 %v389
        %551 = vmatpush.msra.mxu0 %v388
        %552 = vmatmul.f32.gmra.mxu0 %v454
        %v553 = vpop.f32.mrf.mxu0
        %v554 = vadd.f32 %v440, %v553
        %555 = vdwg.mxu0
        %556 = vmatpush.msra.mxu0 0.0
        %557 = vmatpush.msra.mxu0 0.0
        %558 = vmatpush.msra.mxu0 0.0
        %559 = vmatpush.msra.mxu0 0.0
        %560 = vmatpush.msra.mxu0 0.0
        %561 = vmatpush.msra.mxu0 0.0
        %562 = vmatpush.msra.mxu0 0.0
        %563 = vmatpush.msra.mxu0 0.0
        %564 = vmatpush.msra.mxu0 %v403
        %565 = vmatpush.msra.mxu0 %v402
        %566 = vmatpush.msra.mxu0 %v401
        %567 = vmatpush.msra.mxu0 %v400
        %568 = vmatpush.msra.mxu0 %v399
        %569 = vmatpush.msra.mxu0 %v398
        %570 = vmatpush.msra.mxu0 %v397
        %571 = vmatpush.msra.mxu0 %v396
        %572 = vmatmul.f32.gmra.mxu0 %v454
        %v573 = vpop.f32.mrf.mxu0
        %v574 = vadd.f32 %v441, %v573
        %575 = vdwg.mxu0
        %576 = vmatpush.msra.mxu0 0.0
        %577 = vmatpush.msra.mxu0 0.0
        %578 = vmatpush.msra.mxu0 0.0
        %579 = vmatpush.msra.mxu0 0.0
        %580 = vmatpush.msra.mxu0 0.0
        %581 = vmatpush.msra.mxu0 0.0
        %582 = vmatpush.msra.mxu0 0.0
        %583 = vmatpush.msra.mxu0 0.0
        %584 = vmatpush.msra.mxu0 %v411
        %585 = vmatpush.msra.mxu0 %v410
        %586 = vmatpush.msra.mxu0 %v409
        %587 = vmatpush.msra.mxu0 %v408
        %588 = vmatpush.msra.mxu0 %v407
        %589 = vmatpush.msra.mxu0 %v406
        %590 = vmatpush.msra.mxu0 %v405
        %591 = vmatpush.msra.mxu0 %v404
        %592 = vmatmul.f32.gmra.mxu0 %v454
        %v593 = vpop.f32.mrf.mxu0
        %v594 = vadd.f32 %v442, %v593
        %595 = vdwg.mxu0
        %596 = vmatpush.msra.mxu0 0.0
        %597 = vmatpush.msra.mxu0 0.0
        %598 = vmatpush.msra.mxu0 0.0
        %599 = vmatpush.msra.mxu0 0.0
        %600 = vmatpush.msra.mxu0 0.0
        %601 = vmatpush.msra.mxu0 0.0
        %602 = vmatpush.msra.mxu0 0.0
        %603 = vmatpush.msra.mxu0 0.0
        %604 = vmatpush.msra.mxu0 %v419
        %605 = vmatpush.msra.mxu0 %v418
        %606 = vmatpush.msra.mxu0 %v417
        %607 = vmatpush.msra.mxu0 %v416
        %608 = vmatpush.msra.mxu0 %v415
        %609 = vmatpush.msra.mxu0 %v414
        %610 = vmatpush.msra.mxu0 %v413
        %611 = vmatpush.msra.mxu0 %v412
        %612 = vmatmul.f32.gmra.mxu0 %v454
        %v613 = vpop.f32.mrf.mxu0
        %v614 = vadd.f32 %v443, %v613
        %615 = vdwg.mxu0
        %v616 = vld [vmem:[%s3] sm:$0xff]
        %v617 = vld [vmem:[%s3 + $0x8] sm:$0xff]
        %v618 = vld [vmem:[%s3 + $0x10] sm:$0xff]
        %v619 = vld [vmem:[%s3 + $0x18] sm:$0xff]
        %v620 = vld [vmem:[%s3 + $0x20] sm:$0xff]
        %v621 = vld [vmem:[%s3 + $0x28] sm:$0xff]
        %v622 = vld [vmem:[%s3 + $0x30] sm:$0xff]
        %v623 = vld [vmem:[%s3 + $0x38] sm:$0xff]
        %v624 = vld [vmem:[%s3 + $0x40] sm:$0xff]
        %v625 = vld [vmem:[%s3 + $0x48] sm:$0xff]
        %v626 = vld [vmem:[%s3 + $0x50] sm:$0xff]
        %v627 = vld [vmem:[%s3 + $0x58] sm:$0xff]
        %v628 = vld [vmem:[%s3 + $0x60] sm:$0xff]
        %v629 = vld [vmem:[%s3 + $0x68] sm:$0xff]
        %v630 = vld [vmem:[%s3 + $0x70] sm:$0xff]
        %v631 = vld [vmem:[%s3 + $0x78] sm:$0xff]
        %v632 = vld [vmem:[%s3 + $0x80] sm:$0xff]
        %v633 = vld [vmem:[%s3 + $0x88] sm:$0xff]
        %v634 = vld [vmem:[%s3 + $0x90] sm:$0xff]
        %v635 = vld [vmem:[%s3 + $0x98] sm:$0xff]
        %v636 = vld [vmem:[%s3 + $0xa0] sm:$0xff]
        %v637 = vld [vmem:[%s3 + $0xa8] sm:$0xff]
        %v638 = vld [vmem:[%s3 + $0xb0] sm:$0xff]
        %v639 = vld [vmem:[%s3 + $0xb8] sm:$0xff]
        %v640 = vld [vmem:[%s3 + $0xc0] sm:$0xff]
        %v641 = vld [vmem:[%s3 + $0xc8] sm:$0xff]
        %v642 = vld [vmem:[%s3 + $0xd0] sm:$0xff]
        %v643 = vld [vmem:[%s3 + $0xd8] sm:$0xff]
        %v644 = vld [vmem:[%s3 + $0xe0] sm:$0xff]
        %v645 = vld [vmem:[%s3 + $0xe8] sm:$0xff]
        %v646 = vld [vmem:[%s3 + $0xf0] sm:$0xff]
        %v647 = vld [vmem:[%s3 + $0xf8] sm:$0xff]
        %v648 = vld [vmem:[%s3 + $0x100] sm:$0xff]
        %v649 = vld [vmem:[%s3 + $0x108] sm:$0xff]
        %v650 = vld [vmem:[%s3 + $0x110] sm:$0xff]
        %v651 = vld [vmem:[%s3 + $0x118] sm:$0xff]
        %v652 = vld [vmem:[%s3 + $0x120] sm:$0xff]
        %v653 = vld [vmem:[%s3 + $0x128] sm:$0xff]
        %v654 = vld [vmem:[%s3 + $0x130] sm:$0xff]
        %v655 = vld [vmem:[%s3 + $0x138] sm:$0xff]
        %v656 = vld [vmem:[%s3 + $0x140] sm:$0xff]
        %v657 = vld [vmem:[%s3 + $0x148] sm:$0xff]
        %v658 = vld [vmem:[%s3 + $0x150] sm:$0xff]
        %v659 = vld [vmem:[%s3 + $0x158] sm:$0xff]
        %v660 = vld [vmem:[%s3 + $0x160] sm:$0xff]
        %v661 = vld [vmem:[%s3 + $0x168] sm:$0xff]
        %v662 = vld [vmem:[%s3 + $0x170] sm:$0xff]
        %v663 = vld [vmem:[%s3 + $0x178] sm:$0xff]
        %v664 = vld [vmem:[%s3 + $0x180] sm:$0xff]
        %v665 = vld [vmem:[%s3 + $0x188] sm:$0xff]
        %v666 = vld [vmem:[%s3 + $0x190] sm:$0xff]
        %v667 = vld [vmem:[%s3 + $0x198] sm:$0xff]
        %v668 = vld [vmem:[%s3 + $0x1a0] sm:$0xff]
        %v669 = vld [vmem:[%s3 + $0x1a8] sm:$0xff]
        %v670 = vld [vmem:[%s3 + $0x1b0] sm:$0xff]
        %v671 = vld [vmem:[%s3 + $0x1b8] sm:$0xff]
        %v672 = vld [vmem:[%s3 + $0x1c0] sm:$0xff]
        %v673 = vld [vmem:[%s3 + $0x1c8] sm:$0xff]
        %v674 = vld [vmem:[%s3 + $0x1d0] sm:$0xff]
        %v675 = vld [vmem:[%s3 + $0x1d8] sm:$0xff]
        %v676 = vld [vmem:[%s3 + $0x1e0] sm:$0xff]
        %v677 = vld [vmem:[%s3 + $0x1e8] sm:$0xff]
        %v678 = vld [vmem:[%s3 + $0x1f0] sm:$0xff]
        %v679 = vld [vmem:[%s3 + $0x1f8] sm:$0xff]
        %v680 = vld [vmem:[%s4] sm:$0x1]
        %v681 = vld [vmem:[%s4 + $0x1] sm:$0x1]
        %v682 = vld [vmem:[%s4 + $0x2] sm:$0x1]
        %v683 = vld [vmem:[%s4 + $0x3] sm:$0x1]
        %v684 = vld [vmem:[%s4 + $0x4] sm:$0x1]
        %v685 = vld [vmem:[%s4 + $0x5] sm:$0x1]
        %v686 = vld [vmem:[%s4 + $0x6] sm:$0x1]
        %v687 = vld [vmem:[%s4 + $0x7] sm:$0x1]
        %v696 = vperm.slane %v680, 0
        %v697 = vperm.slane %v681, 0
        %v698 = vperm.slane %v682, 0
        %v699 = vperm.slane %v683, 0
        %v700 = vperm.slane %v684, 0
        %v701 = vperm.slane %v685, 0
        %v702 = vperm.slane %v686, 0
        %v703 = vperm.slane %v687, 0
        %712 = vmatpush.msra.mxu0 0.0
        %713 = vmatpush.msra.mxu0 0.0
        %714 = vmatpush.msra.mxu0 0.0
        %715 = vmatpush.msra.mxu0 0.0
        %716 = vmatpush.msra.mxu0 0.0
        %717 = vmatpush.msra.mxu0 0.0
        %718 = vmatpush.msra.mxu0 0.0
        %719 = vmatpush.msra.mxu0 0.0
        %720 = vmatpush.msra.mxu0 %v623
        %721 = vmatpush.msra.mxu0 %v622
        %722 = vmatpush.msra.mxu0 %v621
        %723 = vmatpush.msra.mxu0 %v620
        %724 = vmatpush.msra.mxu0 %v619
        %725 = vmatpush.msra.mxu0 %v618
        %726 = vmatpush.msra.mxu0 %v617
        %727 = vmatpush.msra.mxu0 %v616
        %728 = vmatmul.f32.gmra.mxu0 %v454
        %v729 = vpop.f32.mrf.mxu0
        %v730 = vadd.f32 %v696, %v729
        %731 = vdwg.mxu0
        %732 = vmatpush.msra.mxu0 0.0
        %733 = vmatpush.msra.mxu0 0.0
        %734 = vmatpush.msra.mxu0 0.0
        %735 = vmatpush.msra.mxu0 0.0
        %736 = vmatpush.msra.mxu0 0.0
        %737 = vmatpush.msra.mxu0 0.0
        %738 = vmatpush.msra.mxu0 0.0
        %739 = vmatpush.msra.mxu0 0.0
        %740 = vmatpush.msra.mxu0 %v631
        %741 = vmatpush.msra.mxu0 %v630
        %742 = vmatpush.msra.mxu0 %v629
        %743 = vmatpush.msra.mxu0 %v628
        %744 = vmatpush.msra.mxu0 %v627
        %745 = vmatpush.msra.mxu0 %v626
        %746 = vmatpush.msra.mxu0 %v625
        %747 = vmatpush.msra.mxu0 %v624
        %748 = vmatmul.f32.gmra.mxu0 %v454
        %v749 = vpop.f32.mrf.mxu0
        %v750 = vadd.f32 %v697, %v749
        %751 = vdwg.mxu0
        %752 = vmatpush.msra.mxu0 0.0
        %753 = vmatpush.msra.mxu0 0.0
        %754 = vmatpush.msra.mxu0 0.0
        %755 = vmatpush.msra.mxu0 0.0
        %756 = vmatpush.msra.mxu0 0.0
        %757 = vmatpush.msra.mxu0 0.0
        %758 = vmatpush.msra.mxu0 0.0
        %759 = vmatpush.msra.mxu0 0.0
        %760 = vmatpush.msra.mxu0 %v639
        %761 = vmatpush.msra.mxu0 %v638
        %762 = vmatpush.msra.mxu0 %v637
        %763 = vmatpush.msra.mxu0 %v636
        %764 = vmatpush.msra.mxu0 %v635
        %765 = vmatpush.msra.mxu0 %v634
        %766 = vmatpush.msra.mxu0 %v633
        %767 = vmatpush.msra.mxu0 %v632
        %768 = vmatmul.f32.gmra.mxu0 %v454
        %v769 = vpop.f32.mrf.mxu0
        %v770 = vadd.f32 %v698, %v769
        %771 = vdwg.mxu0
        %772 = vmatpush.msra.mxu0 0.0
        %773 = vmatpush.msra.mxu0 0.0
        %774 = vmatpush.msra.mxu0 0.0
        %775 = vmatpush.msra.mxu0 0.0
        %776 = vmatpush.msra.mxu0 0.0
        %777 = vmatpush.msra.mxu0 0.0
        %778 = vmatpush.msra.mxu0 0.0
        %779 = vmatpush.msra.mxu0 0.0
        %780 = vmatpush.msra.mxu0 %v647
        %781 = vmatpush.msra.mxu0 %v646
        %782 = vmatpush.msra.mxu0 %v645
        %783 = vmatpush.msra.mxu0 %v644
        %784 = vmatpush.msra.mxu0 %v643
        %785 = vmatpush.msra.mxu0 %v642
        %786 = vmatpush.msra.mxu0 %v641
        %787 = vmatpush.msra.mxu0 %v640
        %788 = vmatmul.f32.gmra.mxu0 %v454
        %v789 = vpop.f32.mrf.mxu0
        %v790 = vadd.f32 %v699, %v789
        %791 = vdwg.mxu0
        %792 = vmatpush.msra.mxu0 0.0
        %793 = vmatpush.msra.mxu0 0.0
        %794 = vmatpush.msra.mxu0 0.0
        %795 = vmatpush.msra.mxu0 0.0
        %796 = vmatpush.msra.mxu0 0.0
        %797 = vmatpush.msra.mxu0 0.0
        %798 = vmatpush.msra.mxu0 0.0
        %799 = vmatpush.msra.mxu0 0.0
        %800 = vmatpush.msra.mxu0 %v655
        %801 = vmatpush.msra.mxu0 %v654
        %802 = vmatpush.msra.mxu0 %v653
        %803 = vmatpush.msra.mxu0 %v652
        %804 = vmatpush.msra.mxu0 %v651
        %805 = vmatpush.msra.mxu0 %v650
        %806 = vmatpush.msra.mxu0 %v649
        %807 = vmatpush.msra.mxu0 %v648
        %808 = vmatmul.f32.gmra.mxu0 %v454
        %v809 = vpop.f32.mrf.mxu0
        %v810 = vadd.f32 %v700, %v809
        %811 = vdwg.mxu0
        %812 = vmatpush.msra.mxu0 0.0
        %813 = vmatpush.msra.mxu0 0.0
        %814 = vmatpush.msra.mxu0 0.0
        %815 = vmatpush.msra.mxu0 0.0
        %816 = vmatpush.msra.mxu0 0.0
        %817 = vmatpush.msra.mxu0 0.0
        %818 = vmatpush.msra.mxu0 0.0
        %819 = vmatpush.msra.mxu0 0.0
        %820 = vmatpush.msra.mxu0 %v663
        %821 = vmatpush.msra.mxu0 %v662
        %822 = vmatpush.msra.mxu0 %v661
        %823 = vmatpush.msra.mxu0 %v660
        %824 = vmatpush.msra.mxu0 %v659
        %825 = vmatpush.msra.mxu0 %v658
        %826 = vmatpush.msra.mxu0 %v657
        %827 = vmatpush.msra.mxu0 %v656
        %828 = vmatmul.f32.gmra.mxu0 %v454
        %v829 = vpop.f32.mrf.mxu0
        %v830 = vadd.f32 %v701, %v829
        %831 = vdwg.mxu0
        %832 = vmatpush.msra.mxu0 0.0
        %833 = vmatpush.msra.mxu0 0.0
        %834 = vmatpush.msra.mxu0 0.0
        %835 = vmatpush.msra.mxu0 0.0
        %836 = vmatpush.msra.mxu0 0.0
        %837 = vmatpush.msra.mxu0 0.0
        %838 = vmatpush.msra.mxu0 0.0
        %839 = vmatpush.msra.mxu0 0.0
        %840 = vmatpush.msra.mxu0 %v671
        %841 = vmatpush.msra.mxu0 %v670
        %842 = vmatpush.msra.mxu0 %v669
        %843 = vmatpush.msra.mxu0 %v668
        %844 = vmatpush.msra.mxu0 %v667
        %845 = vmatpush.msra.mxu0 %v666
        %846 = vmatpush.msra.mxu0 %v665
        %847 = vmatpush.msra.mxu0 %v664
        %848 = vmatmul.f32.gmra.mxu0 %v454
        %v849 = vpop.f32.mrf.mxu0
        %v850 = vadd.f32 %v702, %v849
        %851 = vdwg.mxu0
        %852 = vmatpush.msra.mxu0 0.0
        %853 = vmatpush.msra.mxu0 0.0
        %854 = vmatpush.msra.mxu0 0.0
        %855 = vmatpush.msra.mxu0 0.0
        %856 = vmatpush.msra.mxu0 0.0
        %857 = vmatpush.msra.mxu0 0.0
        %858 = vmatpush.msra.mxu0 0.0
        %859 = vmatpush.msra.mxu0 0.0
        %860 = vmatpush.msra.mxu0 %v679
        %861 = vmatpush.msra.mxu0 %v678
        %862 = vmatpush.msra.mxu0 %v677
        %863 = vmatpush.msra.mxu0 %v676
        %864 = vmatpush.msra.mxu0 %v675
        %865 = vmatpush.msra.mxu0 %v674
        %866 = vmatpush.msra.mxu0 %v673
        %867 = vmatpush.msra.mxu0 %v672
        %868 = vmatmul.f32.gmra.mxu0 %v454
        %v869 = vpop.f32.mrf.mxu0
        %v870 = vadd.f32 %v703, %v869
        %871 = vdwg.mxu0
        %v872 = vld [vmem:[%s5] sm:$0xff]
        %v873 = vld [vmem:[%s5 + $0x8] sm:$0xff]
        %v874 = vld [vmem:[%s5 + $0x10] sm:$0xff]
        %v875 = vld [vmem:[%s5 + $0x18] sm:$0xff]
        %v876 = vld [vmem:[%s5 + $0x20] sm:$0xff]
        %v877 = vld [vmem:[%s5 + $0x28] sm:$0xff]
        %v878 = vld [vmem:[%s5 + $0x30] sm:$0xff]
        %v879 = vld [vmem:[%s5 + $0x38] sm:$0xff]
        %v880 = vld [vmem:[%s5 + $0x40] sm:$0xff]
        %v881 = vld [vmem:[%s5 + $0x48] sm:$0xff]
        %v882 = vld [vmem:[%s5 + $0x50] sm:$0xff]
        %v883 = vld [vmem:[%s5 + $0x58] sm:$0xff]
        %v884 = vld [vmem:[%s5 + $0x60] sm:$0xff]
        %v885 = vld [vmem:[%s5 + $0x68] sm:$0xff]
        %v886 = vld [vmem:[%s5 + $0x70] sm:$0xff]
        %v887 = vld [vmem:[%s5 + $0x78] sm:$0xff]
        %v888 = vld [vmem:[%s5 + $0x80] sm:$0xff]
        %v889 = vld [vmem:[%s5 + $0x88] sm:$0xff]
        %v890 = vld [vmem:[%s5 + $0x90] sm:$0xff]
        %v891 = vld [vmem:[%s5 + $0x98] sm:$0xff]
        %v892 = vld [vmem:[%s5 + $0xa0] sm:$0xff]
        %v893 = vld [vmem:[%s5 + $0xa8] sm:$0xff]
        %v894 = vld [vmem:[%s5 + $0xb0] sm:$0xff]
        %v895 = vld [vmem:[%s5 + $0xb8] sm:$0xff]
        %v896 = vld [vmem:[%s5 + $0xc0] sm:$0xff]
        %v897 = vld [vmem:[%s5 + $0xc8] sm:$0xff]
        %v898 = vld [vmem:[%s5 + $0xd0] sm:$0xff]
        %v899 = vld [vmem:[%s5 + $0xd8] sm:$0xff]
        %v900 = vld [vmem:[%s5 + $0xe0] sm:$0xff]
        %v901 = vld [vmem:[%s5 + $0xe8] sm:$0xff]
        %v902 = vld [vmem:[%s5 + $0xf0] sm:$0xff]
        %v903 = vld [vmem:[%s5 + $0xf8] sm:$0xff]
        %v904 = vld [vmem:[%s5 + $0x100] sm:$0xff]
        %v905 = vld [vmem:[%s5 + $0x108] sm:$0xff]
        %v906 = vld [vmem:[%s5 + $0x110] sm:$0xff]
        %v907 = vld [vmem:[%s5 + $0x118] sm:$0xff]
        %v908 = vld [vmem:[%s5 + $0x120] sm:$0xff]
        %v909 = vld [vmem:[%s5 + $0x128] sm:$0xff]
        %v910 = vld [vmem:[%s5 + $0x130] sm:$0xff]
        %v911 = vld [vmem:[%s5 + $0x138] sm:$0xff]
        %v912 = vld [vmem:[%s5 + $0x140] sm:$0xff]
        %v913 = vld [vmem:[%s5 + $0x148] sm:$0xff]
        %v914 = vld [vmem:[%s5 + $0x150] sm:$0xff]
        %v915 = vld [vmem:[%s5 + $0x158] sm:$0xff]
        %v916 = vld [vmem:[%s5 + $0x160] sm:$0xff]
        %v917 = vld [vmem:[%s5 + $0x168] sm:$0xff]
        %v918 = vld [vmem:[%s5 + $0x170] sm:$0xff]
        %v919 = vld [vmem:[%s5 + $0x178] sm:$0xff]
        %v920 = vld [vmem:[%s5 + $0x180] sm:$0xff]
        %v921 = vld [vmem:[%s5 + $0x188] sm:$0xff]
        %v922 = vld [vmem:[%s5 + $0x190] sm:$0xff]
        %v923 = vld [vmem:[%s5 + $0x198] sm:$0xff]
        %v924 = vld [vmem:[%s5 + $0x1a0] sm:$0xff]
        %v925 = vld [vmem:[%s5 + $0x1a8] sm:$0xff]
        %v926 = vld [vmem:[%s5 + $0x1b0] sm:$0xff]
        %v927 = vld [vmem:[%s5 + $0x1b8] sm:$0xff]
        %v928 = vld [vmem:[%s5 + $0x1c0] sm:$0xff]
        %v929 = vld [vmem:[%s5 + $0x1c8] sm:$0xff]
        %v930 = vld [vmem:[%s5 + $0x1d0] sm:$0xff]
        %v931 = vld [vmem:[%s5 + $0x1d8] sm:$0xff]
        %v932 = vld [vmem:[%s5 + $0x1e0] sm:$0xff]
        %v933 = vld [vmem:[%s5 + $0x1e8] sm:$0xff]
        %v934 = vld [vmem:[%s5 + $0x1f0] sm:$0xff]
        %v935 = vld [vmem:[%s5 + $0x1f8] sm:$0xff]
        %v936 = vld [vmem:[%s6] sm:$0x1]
        %v937 = vld [vmem:[%s6 + $0x1] sm:$0x1]
        %v938 = vld [vmem:[%s6 + $0x2] sm:$0x1]
        %v939 = vld [vmem:[%s6 + $0x3] sm:$0x1]
        %v940 = vld [vmem:[%s6 + $0x4] sm:$0x1]
        %v941 = vld [vmem:[%s6 + $0x5] sm:$0x1]
        %v942 = vld [vmem:[%s6 + $0x6] sm:$0x1]
        %v943 = vld [vmem:[%s6 + $0x7] sm:$0x1]
        %v952 = vperm.slane %v936, 0
        %v953 = vperm.slane %v937, 0
        %v954 = vperm.slane %v938, 0
        %v955 = vperm.slane %v939, 0
        %v956 = vperm.slane %v940, 0
        %v957 = vperm.slane %v941, 0
        %v958 = vperm.slane %v942, 0
        %v959 = vperm.slane %v943, 0
        %968 = vmatpush.msra.mxu0 0.0
        %969 = vmatpush.msra.mxu0 0.0
        %970 = vmatpush.msra.mxu0 0.0
        %971 = vmatpush.msra.mxu0 0.0
        %972 = vmatpush.msra.mxu0 0.0
        %973 = vmatpush.msra.mxu0 0.0
        %974 = vmatpush.msra.mxu0 0.0
        %975 = vmatpush.msra.mxu0 0.0
        %976 = vmatpush.msra.mxu0 %v879
        %977 = vmatpush.msra.mxu0 %v878
        %978 = vmatpush.msra.mxu0 %v877
        %979 = vmatpush.msra.mxu0 %v876
        %980 = vmatpush.msra.mxu0 %v875
        %981 = vmatpush.msra.mxu0 %v874
        %982 = vmatpush.msra.mxu0 %v873
        %983 = vmatpush.msra.mxu0 %v872
        %984 = vmatmul.f32.gmra.mxu0 %v454
        %v985 = vpop.f32.mrf.mxu0
        %v986 = vadd.f32 %v952, %v985
        %987 = vdwg.mxu0
        %988 = vmatpush.msra.mxu0 0.0
        %989 = vmatpush.msra.mxu0 0.0
        %990 = vmatpush.msra.mxu0 0.0
        %991 = vmatpush.msra.mxu0 0.0
        %992 = vmatpush.msra.mxu0 0.0
        %993 = vmatpush.msra.mxu0 0.0
        %994 = vmatpush.msra.mxu0 0.0
        %995 = vmatpush.msra.mxu0 0.0
        %996 = vmatpush.msra.mxu0 %v887
        %997 = vmatpush.msra.mxu0 %v886
        %998 = vmatpush.msra.mxu0 %v885
        %999 = vmatpush.msra.mxu0 %v884
        %1000 = vmatpush.msra.mxu0 %v883
        %1001 = vmatpush.msra.mxu0 %v882
        %1002 = vmatpush.msra.mxu0 %v881
        %1003 = vmatpush.msra.mxu0 %v880
        %1004 = vmatmul.f32.gmra.mxu0 %v454
        %v1005 = vpop.f32.mrf.mxu0
        %v1006 = vadd.f32 %v953, %v1005
        %1007 = vdwg.mxu0
        %1008 = vmatpush.msra.mxu0 0.0
        %1009 = vmatpush.msra.mxu0 0.0
        %1010 = vmatpush.msra.mxu0 0.0
        %1011 = vmatpush.msra.mxu0 0.0
        %1012 = vmatpush.msra.mxu0 0.0
        %1013 = vmatpush.msra.mxu0 0.0
        %1014 = vmatpush.msra.mxu0 0.0
        %1015 = vmatpush.msra.mxu0 0.0
        %1016 = vmatpush.msra.mxu0 %v895
        %1017 = vmatpush.msra.mxu0 %v894
        %1018 = vmatpush.msra.mxu0 %v893
        %1019 = vmatpush.msra.mxu0 %v892
        %1020 = vmatpush.msra.mxu0 %v891
        %1021 = vmatpush.msra.mxu0 %v890
        %1022 = vmatpush.msra.mxu0 %v889
        %1023 = vmatpush.msra.mxu0 %v888
        %1024 = vmatmul.f32.gmra.mxu0 %v454
        %v1025 = vpop.f32.mrf.mxu0
        %v1026 = vadd.f32 %v954, %v1025
        %1027 = vdwg.mxu0
        %1028 = vmatpush.msra.mxu0 0.0
        %1029 = vmatpush.msra.mxu0 0.0
        %1030 = vmatpush.msra.mxu0 0.0
        %1031 = vmatpush.msra.mxu0 0.0
        %1032 = vmatpush.msra.mxu0 0.0
        %1033 = vmatpush.msra.mxu0 0.0
        %1034 = vmatpush.msra.mxu0 0.0
        %1035 = vmatpush.msra.mxu0 0.0
        %1036 = vmatpush.msra.mxu0 %v903
        %1037 = vmatpush.msra.mxu0 %v902
        %1038 = vmatpush.msra.mxu0 %v901
        %1039 = vmatpush.msra.mxu0 %v900
        %1040 = vmatpush.msra.mxu0 %v899
        %1041 = vmatpush.msra.mxu0 %v898
        %1042 = vmatpush.msra.mxu0 %v897
        %1043 = vmatpush.msra.mxu0 %v896
        %1044 = vmatmul.f32.gmra.mxu0 %v454
        %v1045 = vpop.f32.mrf.mxu0
        %v1046 = vadd.f32 %v955, %v1045
        %1047 = vdwg.mxu0
        %1048 = vmatpush.msra.mxu0 0.0
        %1049 = vmatpush.msra.mxu0 0.0
        %1050 = vmatpush.msra.mxu0 0.0
        %1051 = vmatpush.msra.mxu0 0.0
        %1052 = vmatpush.msra.mxu0 0.0
        %1053 = vmatpush.msra.mxu0 0.0
        %1054 = vmatpush.msra.mxu0 0.0
        %1055 = vmatpush.msra.mxu0 0.0
        %1056 = vmatpush.msra.mxu0 %v911
        %1057 = vmatpush.msra.mxu0 %v910
        %1058 = vmatpush.msra.mxu0 %v909
        %1059 = vmatpush.msra.mxu0 %v908
        %1060 = vmatpush.msra.mxu0 %v907
        %1061 = vmatpush.msra.mxu0 %v906
        %1062 = vmatpush.msra.mxu0 %v905
        %1063 = vmatpush.msra.mxu0 %v904
        %1064 = vmatmul.f32.gmra.mxu0 %v454
        %v1065 = vpop.f32.mrf.mxu0
        %v1066 = vadd.f32 %v956, %v1065
        %1067 = vdwg.mxu0
        %1068 = vmatpush.msra.mxu0 0.0
        %1069 = vmatpush.msra.mxu0 0.0
        %1070 = vmatpush.msra.mxu0 0.0
        %1071 = vmatpush.msra.mxu0 0.0
        %1072 = vmatpush.msra.mxu0 0.0
        %1073 = vmatpush.msra.mxu0 0.0
        %1074 = vmatpush.msra.mxu0 0.0
        %1075 = vmatpush.msra.mxu0 0.0
        %1076 = vmatpush.msra.mxu0 %v919
        %1077 = vmatpush.msra.mxu0 %v918
        %1078 = vmatpush.msra.mxu0 %v917
        %1079 = vmatpush.msra.mxu0 %v916
        %1080 = vmatpush.msra.mxu0 %v915
        %1081 = vmatpush.msra.mxu0 %v914
        %1082 = vmatpush.msra.mxu0 %v913
        %1083 = vmatpush.msra.mxu0 %v912
        %1084 = vmatmul.f32.gmra.mxu0 %v454
        %v1085 = vpop.f32.mrf.mxu0
        %v1086 = vadd.f32 %v957, %v1085
        %1087 = vdwg.mxu0
        %1088 = vmatpush.msra.mxu0 0.0
        %1089 = vmatpush.msra.mxu0 0.0
        %1090 = vmatpush.msra.mxu0 0.0
        %1091 = vmatpush.msra.mxu0 0.0
        %1092 = vmatpush.msra.mxu0 0.0
        %1093 = vmatpush.msra.mxu0 0.0
        %1094 = vmatpush.msra.mxu0 0.0
        %1095 = vmatpush.msra.mxu0 0.0
        %1096 = vmatpush.msra.mxu0 %v927
        %1097 = vmatpush.msra.mxu0 %v926
        %1098 = vmatpush.msra.mxu0 %v925
        %1099 = vmatpush.msra.mxu0 %v924
        %1100 = vmatpush.msra.mxu0 %v923
        %1101 = vmatpush.msra.mxu0 %v922
        %1102 = vmatpush.msra.mxu0 %v921
        %1103 = vmatpush.msra.mxu0 %v920
        %1104 = vmatmul.f32.gmra.mxu0 %v454
        %v1105 = vpop.f32.mrf.mxu0
        %v1106 = vadd.f32 %v958, %v1105
        %1107 = vdwg.mxu0
        %1108 = vmatpush.msra.mxu0 0.0
        %1109 = vmatpush.msra.mxu0 0.0
        %1110 = vmatpush.msra.mxu0 0.0
        %1111 = vmatpush.msra.mxu0 0.0
        %1112 = vmatpush.msra.mxu0 0.0
        %1113 = vmatpush.msra.mxu0 0.0
        %1114 = vmatpush.msra.mxu0 0.0
        %1115 = vmatpush.msra.mxu0 0.0
        %1116 = vmatpush.msra.mxu0 %v935
        %1117 = vmatpush.msra.mxu0 %v934
        %1118 = vmatpush.msra.mxu0 %v933
        %1119 = vmatpush.msra.mxu0 %v932
        %1120 = vmatpush.msra.mxu0 %v931
        %1121 = vmatpush.msra.mxu0 %v930
        %1122 = vmatpush.msra.mxu0 %v929
        %1123 = vmatpush.msra.mxu0 %v928
        %1124 = vmatmul.f32.gmra.mxu0 %v454
        %v1125 = vpop.f32.mrf.mxu0
        %v1126 = vadd.f32 %v959, %v1125
        %1127 = vdwg.mxu0
        %v1128 = vld [vmem:[%s9] sm:$0xff]
        %vm1129 = vcmask 64512
        %v1131 = vsel %vm1129, %v474, 0
        %v1134 = vsel %vm1129, %v730, 0
        %1136 = vmatpush.xpose.msra.mxu0 0.0
        %1137 = vmatpush.xpose.msra.mxu0 0.0
        %1138 = vmatpush.xpose.msra.mxu0 0.0
        %1139 = vmatpush.xpose.msra.mxu0 0.0
        %1140 = vmatpush.xpose.msra.mxu0 0.0
        %1141 = vmatpush.xpose.msra.mxu0 0.0
        %1142 = vmatpush.xpose.msra.mxu0 0.0
        %1143 = vmatpush.xpose.msra.mxu0 0.0
        %1144 = vmatpush.xpose.msra.mxu0 0.0
        %1145 = vmatpush.xpose.msra.mxu0 0.0
        %1146 = vmatpush.xpose.msra.mxu0 0.0
        %1147 = vmatpush.xpose.msra.mxu0 0.0
        %1148 = vmatpush.xpose.msra.mxu0 0.0
        %1149 = vmatpush.xpose.msra.mxu0 0.0
        %1150 = vmatpush.xpose.msra.mxu0 0.0
        %1151 = vmatpush.xpose.msra.mxu0 %v1134
        %1152 = vmatmul.f32.gmra.mxu0 %v1131
        %v1153 = vpop.f32.mrf.mxu0
        %v1154 = vadd.f32 %v1128, %v1153
        %1155 = vdwg.mxu0
        %v1157 = vsel %vm1129, %v494, 0
        %v1160 = vsel %vm1129, %v750, 0
        %1162 = vmatpush.xpose.msra.mxu0 0.0
        %1163 = vmatpush.xpose.msra.mxu0 0.0
        %1164 = vmatpush.xpose.msra.mxu0 0.0
        %1165 = vmatpush.xpose.msra.mxu0 0.0
        %1166 = vmatpush.xpose.msra.mxu0 0.0
        %1167 = vmatpush.xpose.msra.mxu0 0.0
        %1168 = vmatpush.xpose.msra.mxu0 0.0
        %1169 = vmatpush.xpose.msra.mxu0 0.0
        %1170 = vmatpush.xpose.msra.mxu0 0.0
        %1171 = vmatpush.xpose.msra.mxu0 0.0
        %1172 = vmatpush.xpose.msra.mxu0 0.0
        %1173 = vmatpush.xpose.msra.mxu0 0.0
        %1174 = vmatpush.xpose.msra.mxu0 0.0
        %1175 = vmatpush.xpose.msra.mxu0 0.0
        %1176 = vmatpush.xpose.msra.mxu0 0.0
        %1177 = vmatpush.xpose.msra.mxu0 %v1160
        %1178 = vmatmul.f32.gmra.mxu0 %v1157
        %v1179 = vpop.f32.mrf.mxu0
        %v1180 = vadd.f32 %v1128, %v1179
        %1181 = vdwg.mxu0
        %v1183 = vsel %vm1129, %v514, 0
        %v1186 = vsel %vm1129, %v770, 0
        %1188 = vmatpush.xpose.msra.mxu0 0.0
        %1189 = vmatpush.xpose.msra.mxu0 0.0
        %1190 = vmatpush.xpose.msra.mxu0 0.0
        %1191 = vmatpush.xpose.msra.mxu0 0.0
        %1192 = vmatpush.xpose.msra.mxu0 0.0
        %1193 = vmatpush.xpose.msra.mxu0 0.0
        %1194 = vmatpush.xpose.msra.mxu0 0.0
        %1195 = vmatpush.xpose.msra.mxu0 0.0
        %1196 = vmatpush.xpose.msra.mxu0 0.0
        %1197 = vmatpush.xpose.msra.mxu0 0.0
        %1198 = vmatpush.xpose.msra.mxu0 0.0
        %1199 = vmatpush.xpose.msra.mxu0 0.0
        %1200 = vmatpush.xpose.msra.mxu0 0.0
        %1201 = vmatpush.xpose.msra.mxu0 0.0
        %1202 = vmatpush.xpose.msra.mxu0 0.0
        %1203 = vmatpush.xpose.msra.mxu0 %v1186
        %1204 = vmatmul.f32.gmra.mxu0 %v1183
        %v1205 = vpop.f32.mrf.mxu0
        %v1206 = vadd.f32 %v1128, %v1205
        %1207 = vdwg.mxu0
        %v1209 = vsel %vm1129, %v534, 0
        %v1212 = vsel %vm1129, %v790, 0
        %1214 = vmatpush.xpose.msra.mxu0 0.0
        %1215 = vmatpush.xpose.msra.mxu0 0.0
        %1216 = vmatpush.xpose.msra.mxu0 0.0
        %1217 = vmatpush.xpose.msra.mxu0 0.0
        %1218 = vmatpush.xpose.msra.mxu0 0.0
        %1219 = vmatpush.xpose.msra.mxu0 0.0
        %1220 = vmatpush.xpose.msra.mxu0 0.0
        %1221 = vmatpush.xpose.msra.mxu0 0.0
        %1222 = vmatpush.xpose.msra.mxu0 0.0
        %1223 = vmatpush.xpose.msra.mxu0 0.0
        %1224 = vmatpush.xpose.msra.mxu0 0.0
        %1225 = vmatpush.xpose.msra.mxu0 0.0
        %1226 = vmatpush.xpose.msra.mxu0 0.0
        %1227 = vmatpush.xpose.msra.mxu0 0.0
        %1228 = vmatpush.xpose.msra.mxu0 0.0
        %1229 = vmatpush.xpose.msra.mxu0 %v1212
        %1230 = vmatmul.f32.gmra.mxu0 %v1209
        %v1231 = vpop.f32.mrf.mxu0
        %v1232 = vadd.f32 %v1128, %v1231
        %1233 = vdwg.mxu0
        %v1235 = vsel %vm1129, %v554, 0
        %v1238 = vsel %vm1129, %v810, 0
        %1240 = vmatpush.xpose.msra.mxu0 0.0
        %1241 = vmatpush.xpose.msra.mxu0 0.0
        %1242 = vmatpush.xpose.msra.mxu0 0.0
        %1243 = vmatpush.xpose.msra.mxu0 0.0
        %1244 = vmatpush.xpose.msra.mxu0 0.0
        %1245 = vmatpush.xpose.msra.mxu0 0.0
        %1246 = vmatpush.xpose.msra.mxu0 0.0
        %1247 = vmatpush.xpose.msra.mxu0 0.0
        %1248 = vmatpush.xpose.msra.mxu0 0.0
        %1249 = vmatpush.xpose.msra.mxu0 0.0
        %1250 = vmatpush.xpose.msra.mxu0 0.0
        %1251 = vmatpush.xpose.msra.mxu0 0.0
        %1252 = vmatpush.xpose.msra.mxu0 0.0
        %1253 = vmatpush.xpose.msra.mxu0 0.0
        %1254 = vmatpush.xpose.msra.mxu0 0.0
        %1255 = vmatpush.xpose.msra.mxu0 %v1238
        %1256 = vmatmul.f32.gmra.mxu0 %v1235
        %v1257 = vpop.f32.mrf.mxu0
        %v1258 = vadd.f32 %v1128, %v1257
        %1259 = vdwg.mxu0
        %v1261 = vsel %vm1129, %v574, 0
        %v1264 = vsel %vm1129, %v830, 0
        %1266 = vmatpush.xpose.msra.mxu0 0.0
        %1267 = vmatpush.xpose.msra.mxu0 0.0
        %1268 = vmatpush.xpose.msra.mxu0 0.0
        %1269 = vmatpush.xpose.msra.mxu0 0.0
        %1270 = vmatpush.xpose.msra.mxu0 0.0
        %1271 = vmatpush.xpose.msra.mxu0 0.0
        %1272 = vmatpush.xpose.msra.mxu0 0.0
        %1273 = vmatpush.xpose.msra.mxu0 0.0
        %1274 = vmatpush.xpose.msra.mxu0 0.0
        %1275 = vmatpush.xpose.msra.mxu0 0.0
        %1276 = vmatpush.xpose.msra.mxu0 0.0
        %1277 = vmatpush.xpose.msra.mxu0 0.0
        %1278 = vmatpush.xpose.msra.mxu0 0.0
        %1279 = vmatpush.xpose.msra.mxu0 0.0
        %1280 = vmatpush.xpose.msra.mxu0 0.0
        %1281 = vmatpush.xpose.msra.mxu0 %v1264
        %1282 = vmatmul.f32.gmra.mxu0 %v1261
        %v1283 = vpop.f32.mrf.mxu0
        %v1284 = vadd.f32 %v1128, %v1283
        %1285 = vdwg.mxu0
        %v1287 = vsel %vm1129, %v594, 0
        %v1290 = vsel %vm1129, %v850, 0
        %1292 = vmatpush.xpose.msra.mxu0 0.0
        %1293 = vmatpush.xpose.msra.mxu0 0.0
        %1294 = vmatpush.xpose.msra.mxu0 0.0
        %1295 = vmatpush.xpose.msra.mxu0 0.0
        %1296 = vmatpush.xpose.msra.mxu0 0.0
        %1297 = vmatpush.xpose.msra.mxu0 0.0
        %1298 = vmatpush.xpose.msra.mxu0 0.0
        %1299 = vmatpush.xpose.msra.mxu0 0.0
        %1300 = vmatpush.xpose.msra.mxu0 0.0
        %1301 = vmatpush.xpose.msra.mxu0 0.0
        %1302 = vmatpush.xpose.msra.mxu0 0.0
        %1303 = vmatpush.xpose.msra.mxu0 0.0
        %1304 = vmatpush.xpose.msra.mxu0 0.0
        %1305 = vmatpush.xpose.msra.mxu0 0.0
        %1306 = vmatpush.xpose.msra.mxu0 0.0
        %1307 = vmatpush.xpose.msra.mxu0 %v1290
        %1308 = vmatmul.f32.gmra.mxu0 %v1287
        %v1309 = vpop.f32.mrf.mxu0
        %v1310 = vadd.f32 %v1128, %v1309
        %1311 = vdwg.mxu0
        %v1313 = vsel %vm1129, %v614, 0
        %v1316 = vsel %vm1129, %v870, 0
        %1318 = vmatpush.xpose.msra.mxu0 0.0
        %1319 = vmatpush.xpose.msra.mxu0 0.0
        %1320 = vmatpush.xpose.msra.mxu0 0.0
        %1321 = vmatpush.xpose.msra.mxu0 0.0
        %1322 = vmatpush.xpose.msra.mxu0 0.0
        %1323 = vmatpush.xpose.msra.mxu0 0.0
        %1324 = vmatpush.xpose.msra.mxu0 0.0
        %1325 = vmatpush.xpose.msra.mxu0 0.0
        %1326 = vmatpush.xpose.msra.mxu0 0.0
        %1327 = vmatpush.xpose.msra.mxu0 0.0
        %1328 = vmatpush.xpose.msra.mxu0 0.0
        %1329 = vmatpush.xpose.msra.mxu0 0.0
        %1330 = vmatpush.xpose.msra.mxu0 0.0
        %1331 = vmatpush.xpose.msra.mxu0 0.0
        %1332 = vmatpush.xpose.msra.mxu0 0.0
        %1333 = vmatpush.xpose.msra.mxu0 %v1316
        %1334 = vmatmul.f32.gmra.mxu0 %v1313
        %v1335 = vpop.f32.mrf.mxu0
        %v1336 = vadd.f32 %v1128, %v1335
        %1337 = vdwg.mxu0
        %v1338 = vsel %vm1129, %v1154, -inf
        %1339 = vmax.xlane.f32.xlu0 %v1338
        %v1340 = vpop.xlane.xlu0 %1339
        %v1341 = vsel %vm1129, %v1180, -inf
        %1342 = vmax.xlane.f32.xlu0 %v1341
        %v1343 = vpop.xlane.xlu0 %1342
        %v1344 = vsel %vm1129, %v1206, -inf
        %1345 = vmax.xlane.f32.xlu0 %v1344
        %v1346 = vpop.xlane.xlu0 %1345
        %v1347 = vsel %vm1129, %v1232, -inf
        %1348 = vmax.xlane.f32.xlu0 %v1347
        %v1349 = vpop.xlane.xlu0 %1348
        %v1350 = vsel %vm1129, %v1258, -inf
        %1351 = vmax.xlane.f32.xlu0 %v1350
        %v1352 = vpop.xlane.xlu0 %1351
        %v1353 = vsel %vm1129, %v1284, -inf
        %1354 = vmax.xlane.f32.xlu0 %v1353
        %v1355 = vpop.xlane.xlu0 %1354
        %v1356 = vsel %vm1129, %v1310, -inf
        %1357 = vmax.xlane.f32.xlu0 %v1356
        %v1358 = vpop.xlane.xlu0 %1357
        %v1359 = vsel %vm1129, %v1336, -inf
        %1360 = vmax.xlane.f32.xlu0 %v1359
        %v1361 = vpop.xlane.xlu0 %1360
        %v1362 = vsub.f32 %v1154, %v1340
        %v1363 = vsub.f32 %v1180, %v1343
        %v1364 = vsub.f32 %v1206, %v1346
        %v1365 = vsub.f32 %v1232, %v1349
        %v1366 = vsub.f32 %v1258, %v1352
        %v1367 = vsub.f32 %v1284, %v1355
        %v1368 = vsub.f32 %v1310, %v1358
        %v1369 = vsub.f32 %v1336, %v1361
        %v1370 = vmul.f32 %v1362, 1.442695
        %v1371 = vpow.pop %v1370
        %v1372 = vmul.f32 %v1363, 1.442695
        %v1373 = vpow.pop %v1372
        %v1374 = vmul.f32 %v1364, 1.442695
        %v1375 = vpow.pop %v1374
        %v1376 = vmul.f32 %v1365, 1.442695
        %v1377 = vpow.pop %v1376
        %v1378 = vmul.f32 %v1366, 1.442695
        %v1379 = vpow.pop %v1378
        %v1380 = vmul.f32 %v1367, 1.442695
        %v1381 = vpow.pop %v1380
        %v1382 = vmul.f32 %v1368, 1.442695
        %v1383 = vpow.pop %v1382
        %v1384 = vmul.f32 %v1369, 1.442695
        %v1385 = vpow.pop %v1384
        %v1386 = vsel %vm1129, %v1371, 0.0
        %1387 = vadd.xlane.f32.xlu0 %v1386
        %v1388 = vpop.xlane.xlu0 %1387
        %v1389 = vsel %vm1129, %v1373, 0.0
        %1390 = vadd.xlane.f32.xlu0 %v1389
        %v1391 = vpop.xlane.xlu0 %1390
        %v1392 = vsel %vm1129, %v1375, 0.0
        %1393 = vadd.xlane.f32.xlu0 %v1392
        %v1394 = vpop.xlane.xlu0 %1393
        %v1395 = vsel %vm1129, %v1377, 0.0
        %1396 = vadd.xlane.f32.xlu0 %v1395
        %v1397 = vpop.xlane.xlu0 %1396
        %v1398 = vsel %vm1129, %v1379, 0.0
        %1399 = vadd.xlane.f32.xlu0 %v1398
        %v1400 = vpop.xlane.xlu0 %1399
        %v1401 = vsel %vm1129, %v1381, 0.0
        %1402 = vadd.xlane.f32.xlu0 %v1401
        %v1403 = vpop.xlane.xlu0 %1402
        %v1404 = vsel %vm1129, %v1383, 0.0
        %1405 = vadd.xlane.f32.xlu0 %v1404
        %v1406 = vpop.xlane.xlu0 %1405
        %v1407 = vsel %vm1129, %v1385, 0.0
        %1408 = vadd.xlane.f32.xlu0 %v1407
        %v1409 = vpop.xlane.xlu0 %1408
        %v1411 = vsel %vm1129, %v1371, 0
        %1413 = vmatpush.msra.mxu0 0.0
        %1414 = vmatpush.msra.mxu0 0.0
        %1415 = vmatpush.msra.mxu0 0.0
        %1416 = vmatpush.msra.mxu0 0.0
        %1417 = vmatpush.msra.mxu0 0.0
        %1418 = vmatpush.msra.mxu0 0.0
        %1419 = vmatpush.msra.mxu0 0.0
        %1420 = vmatpush.msra.mxu0 0.0
        %1421 = vmatpush.msra.mxu0 0.0
        %1422 = vmatpush.msra.mxu0 0.0
        %1423 = vmatpush.msra.mxu0 0.0
        %1424 = vmatpush.msra.mxu0 0.0
        %1425 = vmatpush.msra.mxu0 0.0
        %1426 = vmatpush.msra.mxu0 0.0
        %1427 = vmatpush.msra.mxu0 0.0
        %1428 = vmatpush.msra.mxu0 %v986
        %1429 = vmatmul.f32.gmra.mxu0 %v1411
        %v1430 = vpop.f32.mrf.mxu0
        %v1431 = vadd.f32 0.0, %v1430
        %1432 = vdwg.mxu0
        %v1434 = vsel %vm1129, %v1373, 0
        %1436 = vmatpush.msra.mxu0 0.0
        %1437 = vmatpush.msra.mxu0 0.0
        %1438 = vmatpush.msra.mxu0 0.0
        %1439 = vmatpush.msra.mxu0 0.0
        %1440 = vmatpush.msra.mxu0 0.0
        %1441 = vmatpush.msra.mxu0 0.0
        %1442 = vmatpush.msra.mxu0 0.0
        %1443 = vmatpush.msra.mxu0 0.0
        %1444 = vmatpush.msra.mxu0 0.0
        %1445 = vmatpush.msra.mxu0 0.0
        %1446 = vmatpush.msra.mxu0 0.0
        %1447 = vmatpush.msra.mxu0 0.0
        %1448 = vmatpush.msra.mxu0 0.0
        %1449 = vmatpush.msra.mxu0 0.0
        %1450 = vmatpush.msra.mxu0 0.0
        %1451 = vmatpush.msra.mxu0 %v1006
        %1452 = vmatmul.f32.gmra.mxu0 %v1434
        %v1453 = vpop.f32.mrf.mxu0
        %v1454 = vadd.f32 0.0, %v1453
        %1455 = vdwg.mxu0
        %v1457 = vsel %vm1129, %v1375, 0
        %1459 = vmatpush.msra.mxu0 0.0
        %1460 = vmatpush.msra.mxu0 0.0
        %1461 = vmatpush.msra.mxu0 0.0
        %1462 = vmatpush.msra.mxu0 0.0
        %1463 = vmatpush.msra.mxu0 0.0
        %1464 = vmatpush.msra.mxu0 0.0
        %1465 = vmatpush.msra.mxu0 0.0
        %1466 = vmatpush.msra.mxu0 0.0
        %1467 = vmatpush.msra.mxu0 0.0
        %1468 = vmatpush.msra.mxu0 0.0
        %1469 = vmatpush.msra.mxu0 0.0
        %1470 = vmatpush.msra.mxu0 0.0
        %1471 = vmatpush.msra.mxu0 0.0
        %1472 = vmatpush.msra.mxu0 0.0
        %1473 = vmatpush.msra.mxu0 0.0
        %1474 = vmatpush.msra.mxu0 %v1026
        %1475 = vmatmul.f32.gmra.mxu0 %v1457
        %v1476 = vpop.f32.mrf.mxu0
        %v1477 = vadd.f32 0.0, %v1476
        %1478 = vdwg.mxu0
        %v1480 = vsel %vm1129, %v1377, 0
        %1482 = vmatpush.msra.mxu0 0.0
        %1483 = vmatpush.msra.mxu0 0.0
        %1484 = vmatpush.msra.mxu0 0.0
        %1485 = vmatpush.msra.mxu0 0.0
        %1486 = vmatpush.msra.mxu0 0.0
        %1487 = vmatpush.msra.mxu0 0.0
        %1488 = vmatpush.msra.mxu0 0.0
        %1489 = vmatpush.msra.mxu0 0.0
        %1490 = vmatpush.msra.mxu0 0.0
        %1491 = vmatpush.msra.mxu0 0.0
        %1492 = vmatpush.msra.mxu0 0.0
        %1493 = vmatpush.msra.mxu0 0.0
        %1494 = vmatpush.msra.mxu0 0.0
        %1495 = vmatpush.msra.mxu0 0.0
        %1496 = vmatpush.msra.mxu0 0.0
        %1497 = vmatpush.msra.mxu0 %v1046
        %1498 = vmatmul.f32.gmra.mxu0 %v1480
        %v1499 = vpop.f32.mrf.mxu0
        %v1500 = vadd.f32 0.0, %v1499
        %1501 = vdwg.mxu0
        %v1503 = vsel %vm1129, %v1379, 0
        %1505 = vmatpush.msra.mxu0 0.0
        %1506 = vmatpush.msra.mxu0 0.0
        %1507 = vmatpush.msra.mxu0 0.0
        %1508 = vmatpush.msra.mxu0 0.0
        %1509 = vmatpush.msra.mxu0 0.0
        %1510 = vmatpush.msra.mxu0 0.0
        %1511 = vmatpush.msra.mxu0 0.0
        %1512 = vmatpush.msra.mxu0 0.0
        %1513 = vmatpush.msra.mxu0 0.0
        %1514 = vmatpush.msra.mxu0 0.0
        %1515 = vmatpush.msra.mxu0 0.0
        %1516 = vmatpush.msra.mxu0 0.0
        %1517 = vmatpush.msra.mxu0 0.0
        %1518 = vmatpush.msra.mxu0 0.0
        %1519 = vmatpush.msra.mxu0 0.0
        %1520 = vmatpush.msra.mxu0 %v1066
        %1521 = vmatmul.f32.gmra.mxu0 %v1503
        %v1522 = vpop.f32.mrf.mxu0
        %v1523 = vadd.f32 0.0, %v1522
        %1524 = vdwg.mxu0
        %v1526 = vsel %vm1129, %v1381, 0
        %1528 = vmatpush.msra.mxu0 0.0
        %1529 = vmatpush.msra.mxu0 0.0
        %1530 = vmatpush.msra.mxu0 0.0
        %1531 = vmatpush.msra.mxu0 0.0
        %1532 = vmatpush.msra.mxu0 0.0
        %1533 = vmatpush.msra.mxu0 0.0
        %1534 = vmatpush.msra.mxu0 0.0
        %1535 = vmatpush.msra.mxu0 0.0
        %1536 = vmatpush.msra.mxu0 0.0
        %1537 = vmatpush.msra.mxu0 0.0
        %1538 = vmatpush.msra.mxu0 0.0
        %1539 = vmatpush.msra.mxu0 0.0
        %1540 = vmatpush.msra.mxu0 0.0
        %1541 = vmatpush.msra.mxu0 0.0
        %1542 = vmatpush.msra.mxu0 0.0
        %1543 = vmatpush.msra.mxu0 %v1086
        %1544 = vmatmul.f32.gmra.mxu0 %v1526
        %v1545 = vpop.f32.mrf.mxu0
        %v1546 = vadd.f32 0.0, %v1545
        %1547 = vdwg.mxu0
        %v1549 = vsel %vm1129, %v1383, 0
        %1551 = vmatpush.msra.mxu0 0.0
        %1552 = vmatpush.msra.mxu0 0.0
        %1553 = vmatpush.msra.mxu0 0.0
        %1554 = vmatpush.msra.mxu0 0.0
        %1555 = vmatpush.msra.mxu0 0.0
        %1556 = vmatpush.msra.mxu0 0.0
        %1557 = vmatpush.msra.mxu0 0.0
        %1558 = vmatpush.msra.mxu0 0.0
        %1559 = vmatpush.msra.mxu0 0.0
        %1560 = vmatpush.msra.mxu0 0.0
        %1561 = vmatpush.msra.mxu0 0.0
        %1562 = vmatpush.msra.mxu0 0.0
        %1563 = vmatpush.msra.mxu0 0.0
        %1564 = vmatpush.msra.mxu0 0.0
        %1565 = vmatpush.msra.mxu0 0.0
        %1566 = vmatpush.msra.mxu0 %v1106
        %1567 = vmatmul.f32.gmra.mxu0 %v1549
        %v1568 = vpop.f32.mrf.mxu0
        %v1569 = vadd.f32 0.0, %v1568
        %1570 = vdwg.mxu0
        %v1572 = vsel %vm1129, %v1385, 0
        %1574 = vmatpush.msra.mxu0 0.0
        %1575 = vmatpush.msra.mxu0 0.0
        %1576 = vmatpush.msra.mxu0 0.0
        %1577 = vmatpush.msra.mxu0 0.0
        %1578 = vmatpush.msra.mxu0 0.0
        %1579 = vmatpush.msra.mxu0 0.0
        %1580 = vmatpush.msra.mxu0 0.0
        %1581 = vmatpush.msra.mxu0 0.0
        %1582 = vmatpush.msra.mxu0 0.0
        %1583 = vmatpush.msra.mxu0 0.0
        %1584 = vmatpush.msra.mxu0 0.0
        %1585 = vmatpush.msra.mxu0 0.0
        %1586 = vmatpush.msra.mxu0 0.0
        %1587 = vmatpush.msra.mxu0 0.0
        %1588 = vmatpush.msra.mxu0 0.0
        %1589 = vmatpush.msra.mxu0 %v1126
        %1590 = vmatmul.f32.gmra.mxu0 %v1572
        %v1591 = vpop.f32.mrf.mxu0
        %v1592 = vadd.f32 0.0, %v1591
        %1593 = vdwg.mxu0
        %v1594 = vrcp.pop %v1388
        %v1595 = vmul.f32 %v1388, %v1594
        %v1596 = vsub.f32 1.0, %v1595
        %v1597 = vmul.f32 %v1594, %v1596
        %v1598 = vadd.f32 %v1594, %v1597
        %vm1599 = vweird.f32 %v1388
        %vm1600 = vweird.f32 %v1594
        %vm1601 = vmor %vm1599, %vm1600
        %v1602 = vsel %vm1601, %v1594, %v1598
        %v1603 = vand.u32 2147483647, %v1388
        %vm1604 = vcmp.eq.f32.partialorder %v1603, 8.507059e+37
        %v1605 = vand.u32 %v1388, 2147483648
        %v1606 = vor.u32 1.1754944e-38, %v1605
        %v1607 = vsel %vm1604, %v1606, %v1602
        %v1608 = vrcp.pop %v1391
        %v1609 = vmul.f32 %v1391, %v1608
        %v1610 = vsub.f32 1.0, %v1609
        %v1611 = vmul.f32 %v1608, %v1610
        %v1612 = vadd.f32 %v1608, %v1611
        %vm1613 = vweird.f32 %v1391
        %vm1614 = vweird.f32 %v1608
        %vm1615 = vmor %vm1613, %vm1614
        %v1616 = vsel %vm1615, %v1608, %v1612
        %v1617 = vand.u32 2147483647, %v1391
        %vm1618 = vcmp.eq.f32.partialorder %v1617, 8.507059e+37
        %v1619 = vand.u32 %v1391, 2147483648
        %v1620 = vor.u32 1.1754944e-38, %v1619
        %v1621 = vsel %vm1618, %v1620, %v1616
        %v1622 = vrcp.pop %v1394
        %v1623 = vmul.f32 %v1394, %v1622
        %v1624 = vsub.f32 1.0, %v1623
        %v1625 = vmul.f32 %v1622, %v1624
        %v1626 = vadd.f32 %v1622, %v1625
        %vm1627 = vweird.f32 %v1394
        %vm1628 = vweird.f32 %v1622
        %vm1629 = vmor %vm1627, %vm1628
        %v1630 = vsel %vm1629, %v1622, %v1626
        %v1631 = vand.u32 2147483647, %v1394
        %vm1632 = vcmp.eq.f32.partialorder %v1631, 8.507059e+37
        %v1633 = vand.u32 %v1394, 2147483648
        %v1634 = vor.u32 1.1754944e-38, %v1633
        %v1635 = vsel %vm1632, %v1634, %v1630
        %v1636 = vrcp.pop %v1397
        %v1637 = vmul.f32 %v1397, %v1636
        %v1638 = vsub.f32 1.0, %v1637
        %v1639 = vmul.f32 %v1636, %v1638
        %v1640 = vadd.f32 %v1636, %v1639
        %vm1641 = vweird.f32 %v1397
        %vm1642 = vweird.f32 %v1636
        %vm1643 = vmor %vm1641, %vm1642
        %v1644 = vsel %vm1643, %v1636, %v1640
        %v1645 = vand.u32 2147483647, %v1397
        %vm1646 = vcmp.eq.f32.partialorder %v1645, 8.507059e+37
        %v1647 = vand.u32 %v1397, 2147483648
        %v1648 = vor.u32 1.1754944e-38, %v1647
        %v1649 = vsel %vm1646, %v1648, %v1644
        %v1650 = vrcp.pop %v1400
        %v1651 = vmul.f32 %v1400, %v1650
        %v1652 = vsub.f32 1.0, %v1651
        %v1653 = vmul.f32 %v1650, %v1652
        %v1654 = vadd.f32 %v1650, %v1653
        %vm1655 = vweird.f32 %v1400
        %vm1656 = vweird.f32 %v1650
        %vm1657 = vmor %vm1655, %vm1656
        %v1658 = vsel %vm1657, %v1650, %v1654
        %v1659 = vand.u32 2147483647, %v1400
        %vm1660 = vcmp.eq.f32.partialorder %v1659, 8.507059e+37
        %v1661 = vand.u32 %v1400, 2147483648
        %v1662 = vor.u32 1.1754944e-38, %v1661
        %v1663 = vsel %vm1660, %v1662, %v1658
        %v1664 = vrcp.pop %v1403
        %v1665 = vmul.f32 %v1403, %v1664
        %v1666 = vsub.f32 1.0, %v1665
        %v1667 = vmul.f32 %v1664, %v1666
        %v1668 = vadd.f32 %v1664, %v1667
        %vm1669 = vweird.f32 %v1403
        %vm1670 = vweird.f32 %v1664
        %vm1671 = vmor %vm1669, %vm1670
        %v1672 = vsel %vm1671, %v1664, %v1668
        %v1673 = vand.u32 2147483647, %v1403
        %vm1674 = vcmp.eq.f32.partialorder %v1673, 8.507059e+37
        %v1675 = vand.u32 %v1403, 2147483648
        %v1676 = vor.u32 1.1754944e-38, %v1675
        %v1677 = vsel %vm1674, %v1676, %v1672
        %v1678 = vrcp.pop %v1406
        %v1679 = vmul.f32 %v1406, %v1678
        %v1680 = vsub.f32 1.0, %v1679
        %v1681 = vmul.f32 %v1678, %v1680
        %v1682 = vadd.f32 %v1678, %v1681
        %vm1683 = vweird.f32 %v1406
        %vm1684 = vweird.f32 %v1678
        %vm1685 = vmor %vm1683, %vm1684
        %v1686 = vsel %vm1685, %v1678, %v1682
        %v1687 = vand.u32 2147483647, %v1406
        %vm1688 = vcmp.eq.f32.partialorder %v1687, 8.507059e+37
        %v1689 = vand.u32 %v1406, 2147483648
        %v1690 = vor.u32 1.1754944e-38, %v1689
        %v1691 = vsel %vm1688, %v1690, %v1686
        %v1692 = vrcp.pop %v1409
        %v1693 = vmul.f32 %v1409, %v1692
        %v1694 = vsub.f32 1.0, %v1693
        %v1695 = vmul.f32 %v1692, %v1694
        %v1696 = vadd.f32 %v1692, %v1695
        %vm1697 = vweird.f32 %v1409
        %vm1698 = vweird.f32 %v1692
        %vm1699 = vmor %vm1697, %vm1698
        %v1700 = vsel %vm1699, %v1692, %v1696
        %v1701 = vand.u32 2147483647, %v1409
        %vm1702 = vcmp.eq.f32.partialorder %v1701, 8.507059e+37
        %v1703 = vand.u32 %v1409, 2147483648
        %v1704 = vor.u32 1.1754944e-38, %v1703
        %v1705 = vsel %vm1702, %v1704, %v1700
        %v1706 = vmul.f32 %v1431, %v1607
        %v1707 = vmul.f32 %v1454, %v1621
        %v1708 = vmul.f32 %v1477, %v1635
        %v1709 = vmul.f32 %v1500, %v1649
        %v1710 = vmul.f32 %v1523, %v1663
        %v1711 = vmul.f32 %v1546, %v1677
        %v1712 = vmul.f32 %v1569, %v1691
        %v1713 = vmul.f32 %v1592, %v1705
        %v1714 = vld [vmem:[%s7] sm:$0xff]
        %v1715 = vld [vmem:[%s7 + $0x8] sm:$0xff]
        %v1716 = vld [vmem:[%s7 + $0x10] sm:$0xff]
        %v1717 = vld [vmem:[%s7 + $0x18] sm:$0xff]
        %v1718 = vld [vmem:[%s7 + $0x20] sm:$0xff]
        %v1719 = vld [vmem:[%s7 + $0x28] sm:$0xff]
        %v1720 = vld [vmem:[%s7 + $0x30] sm:$0xff]
        %v1721 = vld [vmem:[%s7 + $0x38] sm:$0xff]
        %v1723 = vsel %vm1129, %v1706, 0
        %1725 = vmatpush.msra.mxu0 0.0
        %1726 = vmatpush.msra.mxu0 0.0
        %1727 = vmatpush.msra.mxu0 0.0
        %1728 = vmatpush.msra.mxu0 0.0
        %1729 = vmatpush.msra.mxu0 0.0
        %1730 = vmatpush.msra.mxu0 0.0
        %1731 = vmatpush.msra.mxu0 0.0
        %1732 = vmatpush.msra.mxu0 0.0
        %1733 = vmatpush.msra.mxu0 0.0
        %1734 = vmatpush.msra.mxu0 0.0
        %1735 = vmatpush.msra.mxu0 0.0
        %1736 = vmatpush.msra.mxu0 0.0
        %1737 = vmatpush.msra.mxu0 0.0
        %1738 = vmatpush.msra.mxu0 0.0
        %1739 = vmatpush.msra.mxu0 0.0
        %1740 = vmatpush.msra.mxu0 %v1714
        %1741 = vmatmul.f32.gmra.mxu0 %v1723
        %v1742 = vpop.f32.mrf.mxu0
        %v1743 = vadd.f32 0.0, %v1742
        %1744 = vdwg.mxu0
        %v1746 = vsel %vm1129, %v1707, 0
        %1748 = vmatpush.msra.mxu0 0.0
        %1749 = vmatpush.msra.mxu0 0.0
        %1750 = vmatpush.msra.mxu0 0.0
        %1751 = vmatpush.msra.mxu0 0.0
        %1752 = vmatpush.msra.mxu0 0.0
        %1753 = vmatpush.msra.mxu0 0.0
        %1754 = vmatpush.msra.mxu0 0.0
        %1755 = vmatpush.msra.mxu0 0.0
        %1756 = vmatpush.msra.mxu0 0.0
        %1757 = vmatpush.msra.mxu0 0.0
        %1758 = vmatpush.msra.mxu0 0.0
        %1759 = vmatpush.msra.mxu0 0.0
        %1760 = vmatpush.msra.mxu0 0.0
        %1761 = vmatpush.msra.mxu0 0.0
        %1762 = vmatpush.msra.mxu0 0.0
        %1763 = vmatpush.msra.mxu0 %v1715
        %1764 = vmatmul.f32.gmra.mxu0 %v1746
        %v1765 = vpop.f32.mrf.mxu0
        %v1766 = vadd.f32 0.0, %v1765
        %1767 = vdwg.mxu0
        %v1769 = vsel %vm1129, %v1708, 0
        %1771 = vmatpush.msra.mxu0 0.0
        %1772 = vmatpush.msra.mxu0 0.0
        %1773 = vmatpush.msra.mxu0 0.0
        %1774 = vmatpush.msra.mxu0 0.0
        %1775 = vmatpush.msra.mxu0 0.0
        %1776 = vmatpush.msra.mxu0 0.0
        %1777 = vmatpush.msra.mxu0 0.0
        %1778 = vmatpush.msra.mxu0 0.0
        %1779 = vmatpush.msra.mxu0 0.0
        %1780 = vmatpush.msra.mxu0 0.0
        %1781 = vmatpush.msra.mxu0 0.0
        %1782 = vmatpush.msra.mxu0 0.0
        %1783 = vmatpush.msra.mxu0 0.0
        %1784 = vmatpush.msra.mxu0 0.0
        %1785 = vmatpush.msra.mxu0 0.0
        %1786 = vmatpush.msra.mxu0 %v1716
        %1787 = vmatmul.f32.gmra.mxu0 %v1769
        %v1788 = vpop.f32.mrf.mxu0
        %v1789 = vadd.f32 0.0, %v1788
        %1790 = vdwg.mxu0
        %v1792 = vsel %vm1129, %v1709, 0
        %1794 = vmatpush.msra.mxu0 0.0
        %1795 = vmatpush.msra.mxu0 0.0
        %1796 = vmatpush.msra.mxu0 0.0
        %1797 = vmatpush.msra.mxu0 0.0
        %1798 = vmatpush.msra.mxu0 0.0
        %1799 = vmatpush.msra.mxu0 0.0
        %1800 = vmatpush.msra.mxu0 0.0
        %1801 = vmatpush.msra.mxu0 0.0
        %1802 = vmatpush.msra.mxu0 0.0
        %1803 = vmatpush.msra.mxu0 0.0
        %1804 = vmatpush.msra.mxu0 0.0
        %1805 = vmatpush.msra.mxu0 0.0
        %1806 = vmatpush.msra.mxu0 0.0
        %1807 = vmatpush.msra.mxu0 0.0
        %1808 = vmatpush.msra.mxu0 0.0
        %1809 = vmatpush.msra.mxu0 %v1717
        %1810 = vmatmul.f32.gmra.mxu0 %v1792
        %v1811 = vpop.f32.mrf.mxu0
        %v1812 = vadd.f32 0.0, %v1811
        %1813 = vdwg.mxu0
        %v1815 = vsel %vm1129, %v1710, 0
        %1817 = vmatpush.msra.mxu0 0.0
        %1818 = vmatpush.msra.mxu0 0.0
        %1819 = vmatpush.msra.mxu0 0.0
        %1820 = vmatpush.msra.mxu0 0.0
        %1821 = vmatpush.msra.mxu0 0.0
        %1822 = vmatpush.msra.mxu0 0.0
        %1823 = vmatpush.msra.mxu0 0.0
        %1824 = vmatpush.msra.mxu0 0.0
        %1825 = vmatpush.msra.mxu0 0.0
        %1826 = vmatpush.msra.mxu0 0.0
        %1827 = vmatpush.msra.mxu0 0.0
        %1828 = vmatpush.msra.mxu0 0.0
        %1829 = vmatpush.msra.mxu0 0.0
        %1830 = vmatpush.msra.mxu0 0.0
        %1831 = vmatpush.msra.mxu0 0.0
        %1832 = vmatpush.msra.mxu0 %v1718
        %1833 = vmatmul.f32.gmra.mxu0 %v1815
        %v1834 = vpop.f32.mrf.mxu0
        %v1835 = vadd.f32 0.0, %v1834
        %1836 = vdwg.mxu0
        %v1838 = vsel %vm1129, %v1711, 0
        %1840 = vmatpush.msra.mxu0 0.0
        %1841 = vmatpush.msra.mxu0 0.0
        %1842 = vmatpush.msra.mxu0 0.0
        %1843 = vmatpush.msra.mxu0 0.0
        %1844 = vmatpush.msra.mxu0 0.0
        %1845 = vmatpush.msra.mxu0 0.0
        %1846 = vmatpush.msra.mxu0 0.0
        %1847 = vmatpush.msra.mxu0 0.0
        %1848 = vmatpush.msra.mxu0 0.0
        %1849 = vmatpush.msra.mxu0 0.0
        %1850 = vmatpush.msra.mxu0 0.0
        %1851 = vmatpush.msra.mxu0 0.0
        %1852 = vmatpush.msra.mxu0 0.0
        %1853 = vmatpush.msra.mxu0 0.0
        %1854 = vmatpush.msra.mxu0 0.0
        %1855 = vmatpush.msra.mxu0 %v1719
        %1856 = vmatmul.f32.gmra.mxu0 %v1838
        %v1857 = vpop.f32.mrf.mxu0
        %v1858 = vadd.f32 0.0, %v1857
        %1859 = vdwg.mxu0
        %v1861 = vsel %vm1129, %v1712, 0
        %1863 = vmatpush.msra.mxu0 0.0
        %1864 = vmatpush.msra.mxu0 0.0
        %1865 = vmatpush.msra.mxu0 0.0
        %1866 = vmatpush.msra.mxu0 0.0
        %1867 = vmatpush.msra.mxu0 0.0
        %1868 = vmatpush.msra.mxu0 0.0
        %1869 = vmatpush.msra.mxu0 0.0
        %1870 = vmatpush.msra.mxu0 0.0
        %1871 = vmatpush.msra.mxu0 0.0
        %1872 = vmatpush.msra.mxu0 0.0
        %1873 = vmatpush.msra.mxu0 0.0
        %1874 = vmatpush.msra.mxu0 0.0
        %1875 = vmatpush.msra.mxu0 0.0
        %1876 = vmatpush.msra.mxu0 0.0
        %1877 = vmatpush.msra.mxu0 0.0
        %1878 = vmatpush.msra.mxu0 %v1720
        %1879 = vmatmul.f32.gmra.mxu0 %v1861
        %v1880 = vpop.f32.mrf.mxu0
        %v1881 = vadd.f32 0.0, %v1880
        %1882 = vdwg.mxu0
        %v1884 = vsel %vm1129, %v1713, 0
        %1886 = vmatpush.msra.mxu0 0.0
        %1887 = vmatpush.msra.mxu0 0.0
        %1888 = vmatpush.msra.mxu0 0.0
        %1889 = vmatpush.msra.mxu0 0.0
        %1890 = vmatpush.msra.mxu0 0.0
        %1891 = vmatpush.msra.mxu0 0.0
        %1892 = vmatpush.msra.mxu0 0.0
        %1893 = vmatpush.msra.mxu0 0.0
        %1894 = vmatpush.msra.mxu0 0.0
        %1895 = vmatpush.msra.mxu0 0.0
        %1896 = vmatpush.msra.mxu0 0.0
        %1897 = vmatpush.msra.mxu0 0.0
        %1898 = vmatpush.msra.mxu0 0.0
        %1899 = vmatpush.msra.mxu0 0.0
        %1900 = vmatpush.msra.mxu0 0.0
        %1901 = vmatpush.msra.mxu0 %v1721
        %1902 = vmatmul.f32.gmra.mxu0 %v1884
        %v1903 = vpop.f32.mrf.mxu0
        %v1904 = vadd.f32 0.0, %v1903
        %1905 = vdwg.mxu0
        %v1906 = vsel %vm452, %v1743, 0.0
        %v1907 = vsel %vm452, %v1766, 0.0
        %v1908 = vadd.f32 %v1906, %v1907
        %v1909 = vsel %vm452, %v1789, 0.0
        %v1910 = vadd.f32 %v1908, %v1909
        %v1911 = vsel %vm452, %v1812, 0.0
        %v1912 = vadd.f32 %v1910, %v1911
        %v1913 = vsel %vm452, %v1835, 0.0
        %v1914 = vadd.f32 %v1912, %v1913
        %v1915 = vsel %vm452, %v1858, 0.0
        %v1916 = vadd.f32 %v1914, %v1915
        %v1917 = vsel %vm452, %v1881, 0.0
        %v1918 = vadd.f32 %v1916, %v1917
        %v1919 = vsel %vm452, %v1904, 0.0
        %v1920 = vadd.f32 %v1918, %v1919
        %v1921 = vld [vmem:[%s8] sm:$0x1]
        %v1923 = vperm.slane %v1921, 0
        %v1925 = vadd.f32 %v1920, %v1923
        %1926 = vst.msk [vmem:[%s350] sm:$0xff] %vm452, %v1925
        %s1927 = sand.u32 %s247, 1
        %s1928 = scalar_lea.sflag [#allocation3], %s1927
        %s1929 = sand.u32 %s247, 1
        %s1930 = smul.addr %s1929, 8
        %s1931 = scalar_lea.vmem [#allocation2], %s1930
        // Predicated region
        $region61: #{tpu_custom_call.1} parent=59 // pred_check
          %p1932 = pneg %p257
        $region62: #{tpu_custom_call.1} parent=59 // pred_check_branch
          %1934 = sbr.rel (%p1932) target = $region64
        $region63: #{tpu_custom_call.1} parent=59 // pred_region
          %1936 = vsyncadd %s1928, 0
          %s1937 = smul.addr %s24, 8
          %s1938 = scalar_lea.hbm %s10, %s1937
          %s1940 = sshll.u32 %s1931, 4
          %s1941 = int_to_ptr.vmem [resolvable:$true] %s1940
          %s1942 = sshll.u32 %s1938, 4
          %s1943 = int_to_ptr.hbm [resolvable:$true] %s1942
          %1945 = dma.vmem_to_hbm [thread:$0]  %s1941, 128, %s1943, %s1928
        $region64: #{tpu_custom_call.1} parent=59 // pred_fallthru
          _
      $region60: #{tpu_custom_call.1} parent=5 // pred_fallthru
        _
      %p1946 = scmp.le.s32.totalorder 2, %s19
      // Predicated region
      $region65: #{tpu_custom_call.1} parent=5 // pred_check
        %p1947 = pneg %p1946
      $region66: #{tpu_custom_call.1} parent=5 // pred_check_branch
        %1949 = sbr.rel (%p1947) target = $region68
      $region67: #{tpu_custom_call.1} parent=5 // pred_region
        %s1950 = ssub.s32 %s19, 2
        // Predicated region
        $region69: #{tpu_custom_call.1} parent=67 // pred_check
          %p1951 = pneg %p263
        $region70: #{tpu_custom_call.1} parent=67 // pred_check_branch
          %1953 = sbr.rel (%p1951) target = $region72
        $region71: #{tpu_custom_call.1} parent=67 // pred_region
          %s1954 = sand.u32 %s248, 1
          %s1955 = scalar_lea.sflag [#allocation3], %s1954
          %s1956 = sand.u32 %s248, 1
          %s1957 = smul.addr %s1956, 8
          %s1958 = scalar_lea.vmem [#allocation2], %s1957
          %1960 = dma.done %s1955, 128
        $region72: #{tpu_custom_call.1} parent=67 // pred_fallthru
          _
      $region68: #{tpu_custom_call.1} parent=5 // pred_fallthru
        _
    $region6: #{tpu_custom_call.1} parent=1 // loop_footer
      %s23 = sadd.s32 1, %s19
    $region7: #{tpu_custom_call.1} parent=1 // loop_footer_branch
      %18 = sbr.rel target = $region3
    $region8: #{tpu_custom_call.1} parent=1 // loop_exit
      _
    %1961 = vsyncpa [#allocation3], 1
    %s1962 = scalar_lea.sflag [#allocation3], 1
    %1963 = vsyncpa %s1962, 1

</llo_original>
